<compile_context>
chip_gen: v5e
topology: v5e:2x2
jax: 0.10.0
libtpu: 0.0.40
codegen_flags: <defaults>
</compile_context>

<pallas_src>
import functools

import jax
import jax.numpy as jnp
from jax.experimental import pallas as pl
from jax.experimental.pallas import tpu as pltpu

_LN_EPS = 1e-5
_INV_SQRT2 = 0.7071067811865476


def _cdiv(a, b):
    return (a + b - 1) // b


def _round_up(v, m):
    return (v + m - 1) // m * m


@functools.lru_cache(maxsize=1)
def _vmem_limit_bytes():
    """Generation-aware VMEM budget (~85% of capacity, headroom for temporaries)."""
    cap = None
    try:
        cap = getattr(pltpu.get_tpu_info(), "vmem_capacity_bytes", None)
    except Exception:
        cap = None
    if not cap:
        cap = 64 * 1024 * 1024  # conservative fallback (v7x per-TC size)
    return int(cap * 0.85)


def _pick_block_hidden(dim, hidden, vmem_limit):
    """Largest hidden tile that keeps weight VMEM comfortable.

    Fully resident (single k step) when all three bf16 weight slabs fit in half the
    budget; otherwise a 128-multiple divisor of hidden sized so double-buffered
    per-tile slabs stay within ~1/3 of the budget.
    """
    resident_bytes = 3 * dim * hidden * 2  # bf16, single-buffered
    if resident_bytes <= vmem_limit // 2 or hidden % 128 != 0:
        return hidden  # non-128 hidden uses the full-dim escape hatch
    budget = vmem_limit // 3
    th = hidden
    while th > 128 and (hidden % th != 0 or 2 * 3 * dim * th * 2 > budget):
        th -= 128
    return th


def _ffn_kernel(x_ref, g_ref, b_ref,
                w1a_ref, b1a_ref, w1b_ref, b1b_ref,
                w2_ref, b2_ref, o_ref,
                xn_scratch, acc_scratch, *, approximate_gelu):
    # x_ref: (TM, D) f32     gamma/beta/b2: (1, D) f32
    # w1a/w1b: (D, TH) bf16  b1a/b1b: (1, TH) f32   w2: (TH, D) bf16
    k = pl.program_id(1)

    # --- k == 0: LayerNorm the token tile once, cache bf16 result; zero the acc ---
    @pl.when(k == 0)
    def _():
        x = x_ref[...].astype(jnp.float32)
        mean = jnp.mean(x, axis=-1, keepdims=True)
        centered = x - mean
        var = jnp.mean(centered * centered, axis=-1, keepdims=True)
        xn = centered * jax.lax.rsqrt(var + _LN_EPS)
        xn = xn * g_ref[...] + b_ref[...]
        xn_scratch[...] = xn.astype(jnp.bfloat16)
        acc_scratch[...] = jnp.zeros_like(acc_scratch)

    xn_bf = xn_scratch[...]

    # --- Linear(dim, 2*hidden), restricted to this hidden tile (two TH-wide matmuls,
    #     bf16 operands -> native MXU rate, f32 accumulation) ---
    a = jnp.dot(xn_bf, w1a_ref[...], preferred_element_type=jnp.float32) + b1a_ref[...]
    gates = jnp.dot(xn_bf, w1b_ref[...], preferred_element_type=jnp.float32) + b1b_ref[...]

    # --- GEGLU: a * gelu(gates) ---
    if approximate_gelu:
        gelu_gates = jax.nn.gelu(gates, approximate=True)  # tanh -> EUP slot
    else:
        # exact erf (matches torch F.gelu default)
        gelu_gates = 0.5 * gates * (1.0 + jax.lax.erf(gates * _INV_SQRT2))
    y = (a * gelu_gates).astype(jnp.bfloat16)

    # --- Linear(hidden, dim): accumulate this hidden tile's contribution ---
    acc_scratch[...] += jnp.dot(y, w2_ref[...], preferred_element_type=jnp.float32)

    @pl.when(k == pl.num_programs(1) - 1)
    def _():
        o_ref[...] = (acc_scratch[...] + b2_ref[...]).astype(o_ref.dtype)


def prepare_params(ln_gamma, ln_beta, w1, b1, w2, b2):
    """One-time weight preparation (call ONCE; do not redo per forward call).

    Splits w1 into its GEGLU halves and casts the big matrices to bf16 so the
    per-call path never re-reads/re-casts f32 weights in HBM.
    Weight layout: w1 (dim, 2*hidden), b1 (2*hidden,), w2 (hidden, dim), b2 (dim,).
    """
    dim, two_h = w1.shape
    hidden = two_h // 2
    return dict(
        gamma=jnp.asarray(ln_gamma, jnp.float32).reshape(1, dim),
        beta=jnp.asarray(ln_beta, jnp.float32).reshape(1, dim),
        w1a=jnp.asarray(w1[:, :hidden], jnp.bfloat16),
        w1b=jnp.asarray(w1[:, hidden:], jnp.bfloat16),
        b1a=jnp.asarray(b1[:hidden], jnp.float32).reshape(1, hidden),
        b1b=jnp.asarray(b1[hidden:], jnp.float32).reshape(1, hidden),
        w2=jnp.asarray(w2, jnp.bfloat16),
        b2=jnp.asarray(b2, jnp.float32).reshape(1, dim),
    )


@functools.partial(jax.jit,
                   static_argnames=("block_tokens", "block_hidden", "approximate_gelu"))
def feedforward(x, params, *, block_tokens=256, block_hidden=None,
                approximate_gelu=False):
    """x: (batch, seq, dim) float32; params from prepare_params()."""
    batch, seq, dim = x.shape
    hidden = params["w2"].shape[0]
    n = batch * seq
    vmem_limit = _vmem_limit_bytes()

    # Token tile: multiple of 16 (bf16 sublane packing); ensure >=2 tiles when
    # possible so v7x's two TensorCores both get work on the parallel axis.
    tm = min(block_tokens, _round_up(n, 16))
    if n >= 32 and _cdiv(n, tm) < 2:
        tm = max(16, _round_up(_cdiv(n, 2), 16))

    # Hidden tile (reduction axis).
    if block_hidden is None:
        th = _pick_block_hidden(dim, hidden, vmem_limit)
    else:
        th = block_hidden
        assert hidden % th == 0, "block_hidden must divide hidden"
    num_h = hidden // th

    x2d = x.reshape(n, dim)
    grid = (_cdiv(n, tm), num_h)  # reduction (hidden) axis last

    token_spec = pl.BlockSpec((tm, dim), lambda i, k: (i, 0))
    const_mode = pl.Buffered(1)  # constant-index small params: no double-buffering
    # Weight blocks: single-buffered when fully resident (constant index), otherwise
    # keep default double-buffering so the next hidden tile's DMA overlaps compute.
    resident = (num_h == 1)

    def w_spec(shape, index_map):
        if resident:
            return pl.BlockSpec(shape, index_map, pipeline_mode=pl.Buffered(1))
        return pl.BlockSpec(shape, index_map)

    flops = 2 * n * dim * 3 * hidden
    bytes_accessed = (2 * n * dim * 4                          # x in + out (f32)
                      + _cdiv(n, tm) * 3 * dim * hidden * 2    # bf16 weight streams
                      + (2 * hidden + 3 * dim) * 4)            # biases + LN params
    cost = pl.CostEstimate(flops=flops, transcendentals=n * hidden,
                           bytes_accessed=bytes_accessed)

    out2d = pl.pallas_call(
        functools.partial(_ffn_kernel, approximate_gelu=approximate_gelu),
        out_shape=jax.ShapeDtypeStruct((n, dim), x.dtype),
        grid=grid,
        in_specs=[
            token_spec,                                                           # x
            pl.BlockSpec((1, dim), lambda i, k: (0, 0), pipeline_mode=const_mode),  # gamma
            pl.BlockSpec((1, dim), lambda i, k: (0, 0), pipeline_mode=const_mode),  # beta
            w_spec((dim, th), lambda i, k: (0, k)),                               # w1a
            w_spec((1, th), lambda i, k: (0, k)),                                 # b1a
            w_spec((dim, th), lambda i, k: (0, k)),                               # w1b
            w_spec((1, th), lambda i, k: (0, k)),                                 # b1b
            w_spec((th, dim), lambda i, k: (k, 0)),                               # w2
            pl.BlockSpec((1, dim), lambda i, k: (0, 0), pipeline_mode=const_mode),  # b2
        ],
        out_specs=token_spec,
        scratch_shapes=[
            pltpu.VMEM((tm, dim), jnp.bfloat16),  # cached LayerNorm(x) tile
            pltpu.VMEM((tm, dim), jnp.float32),   # f32 accumulator over hidden tiles
        ],
        compiler_params=pltpu.CompilerParams(
            dimension_semantics=("parallel", "arbitrary"),
            vmem_limit_bytes=vmem_limit,
        ),
        cost_estimate=cost,
    )(
        x2d,
        params["gamma"], params["beta"],
        params["w1a"], params["b1a"], params["w1b"], params["b1b"],
        params["w2"], params["b2"],
    )
    # NOTE: padded boundary rows (n % tm != 0) are safe because all math is
    # row-wise along dim; any token-axis reduction added later must mask them.
    return out2d.reshape(batch, seq, dim)


def init_params(key, dim, mult=4):
    hidden = dim * mult
    k1, k2, k3, k4 = jax.random.split(key, 4)
    ln_gamma = jnp.ones((dim,), jnp.float32)   # PyTorch LayerNorm default init
    ln_beta = jnp.zeros((dim,), jnp.float32)
    w1 = jax.random.normal(k1, (dim, 2 * hidden), jnp.float32) * 0.02
    b1 = jax.random.normal(k2, (2 * hidden,), jnp.float32) * 0.02
    w2 = jax.random.normal(k3, (hidden, dim), jnp.float32) * 0.02
    b2 = jax.random.normal(k4, (dim,), jnp.float32) * 0.02
    return ln_gamma, ln_beta, w1, b1, w2, b2


def _reference(x, ln_gamma, ln_beta, w1, b1, w2, b2, *, approximate_gelu=False):
    mean = jnp.mean(x, axis=-1, keepdims=True)
    var = jnp.mean((x - mean) ** 2, axis=-1, keepdims=True)
    xn = (x - mean) / jnp.sqrt(var + _LN_EPS) * ln_gamma + ln_beta
    h = xn @ w1 + b1
    a, gates = jnp.split(h, 2, axis=-1)
    if approximate_gelu:
        g = jax.nn.gelu(gates, approximate=True)
    else:
        g = 0.5 * gates * (1.0 + jax.lax.erf(gates * _INV_SQRT2))
    return (a * g) @ w2 + b2


if __name__ == "__main__":
    # dim a multiple of 128 for lane-dense stores / full MXU columns (per review).
    batch, seq, dim, mult = 2, 8, 128, 4
    hidden = dim * mult

    key = jax.random.PRNGKey(0)
    kx, kp = jax.random.split(key)
    x = jax.random.normal(kx, (batch, seq, dim), jnp.float32)
    raw = init_params(kp, dim, mult)
    params = prepare_params(*raw)

    # Tolerance reflects bf16 matmul operands (f32 accumulation) vs f32 reference.
    tol = dict(atol=5e-3, rtol=5e-3)

    # 1) Default config: exact-erf GELU (matches torch F.gelu), resident weights.
    out = jax.block_until_ready(feedforward(x, params))
    ref = _reference(x, *raw, approximate_gelu=False)
    assert out.shape == (batch, seq, dim)
    assert jnp.allclose(out, ref, **tol), "mismatch (default config)"

    # 2) Exercise the hidden-axis reduction grid (2 hidden tiles).
    out_h = jax.block_until_ready(feedforward(x, params, block_hidden=hidden // 2))
    assert jnp.allclose(out_h, ref, **tol), "mismatch (hidden-tiled config)"

    # 3) Tanh-approx GELU path (EUP; recommended on v6e/v7x when numerics allow).
    out_t = jax.block_until_ready(feedforward(x, params, approximate_gelu=True))
    ref_t = _reference(x, *raw, approximate_gelu=True)
    assert jnp.allclose(out_t, ref_t, **tol), "mismatch (tanh-gelu config)"

    print("KERNEL_OK")
</pallas_src>

<mosaic_0001>
module attributes {stable_mosaic.version = 11 : i64} {
  func.func @_ffn_kernel(%arg0: i32, %arg1: i32, %arg2: memref<16x128xf32, #tpu.memory_space<vmem>>, %arg3: memref<1x128xf32, #tpu.memory_space<vmem>>, %arg4: memref<1x128xf32, #tpu.memory_space<vmem>>, %arg5: memref<128x512xbf16, #tpu.memory_space<vmem>>, %arg6: memref<1x512xf32, #tpu.memory_space<vmem>>, %arg7: memref<128x512xbf16, #tpu.memory_space<vmem>>, %arg8: memref<1x512xf32, #tpu.memory_space<vmem>>, %arg9: memref<512x128xbf16, #tpu.memory_space<vmem>>, %arg10: memref<1x128xf32, #tpu.memory_space<vmem>>, %arg11: memref<16x128xf32, #tpu.memory_space<vmem>>, %arg12: memref<16x128xbf16, #tpu.memory_space<vmem>>, %arg13: memref<16x128xf32, #tpu.memory_space<vmem>>) attributes {dimension_semantics = [#tpu.dimension_semantics<parallel>, #tpu.dimension_semantics<arbitrary>], iteration_bounds = array<i64: 1, 1>, scalar_prefetch = 0 : i64, scratch_operands = 2 : i64, tpu.core_type = #tpu.core_type<tc>, window_params = [{transform_indices = @transform_0, window_bounds = array<i64: 16, 128>}, {pipeline_mode = #tpu.pipeline_mode<synchronous>, transform_indices = @transform_1, window_bounds = array<i64: 1, 128>}, {pipeline_mode = #tpu.pipeline_mode<synchronous>, transform_indices = @transform_2, window_bounds = array<i64: 1, 128>}, {pipeline_mode = #tpu.pipeline_mode<synchronous>, transform_indices = @transform_3, window_bounds = array<i64: 128, 512>}, {pipeline_mode = #tpu.pipeline_mode<synchronous>, transform_indices = @transform_4, window_bounds = array<i64: 1, 512>}, {pipeline_mode = #tpu.pipeline_mode<synchronous>, transform_indices = @transform_5, window_bounds = array<i64: 128, 512>}, {pipeline_mode = #tpu.pipeline_mode<synchronous>, transform_indices = @transform_6, window_bounds = array<i64: 1, 512>}, {pipeline_mode = #tpu.pipeline_mode<synchronous>, transform_indices = @transform_7, window_bounds = array<i64: 512, 128>}, {pipeline_mode = #tpu.pipeline_mode<synchronous>, transform_indices = @transform_8, window_bounds = array<i64: 1, 128>}, {transform_indices = @transform_9, window_bounds = array<i64: 16, 128>}]} {
    %c0_i32 = arith.constant 0 : i32
    %0 = arith.cmpi eq, %arg1, %c0_i32 : i32
    %1 = arith.extui %0 : i1 to i32
    %c0_i32_0 = arith.constant 0 : i32
    %2 = arith.cmpi ne, %1, %c0_i32_0 : i32
    scf.if %2 {
      %c0_23 = arith.constant 0 : index
      %c0_24 = arith.constant 0 : index
      %32 = vector.load %arg2[%c0_23, %c0_24] : memref<16x128xf32, #tpu.memory_space<vmem>>, vector<16x128xf32>
      %cst_25 = arith.constant dense<0.000000e+00> : vector<16xf32>
      %33 = vector.multi_reduction <add>, %32, %cst_25 [1] : vector<16x128xf32> to vector<16xf32>
      %34 = vector.shape_cast %33 : vector<16xf32> to vector<16x1xf32>
      %cst_26 = arith.constant 1.280000e+02 : f32
      %35 = vector.broadcast %cst_26 : f32 to vector<16x1xf32>
      %36 = arith.divf %34, %35 : vector<16x1xf32>
      %37 = vector.broadcast %36 : vector<16x1xf32> to vector<16x128xf32>
      %38 = arith.subf %32, %37 : vector<16x128xf32>
      %39 = arith.mulf %38, %38 : vector<16x128xf32>
      %cst_27 = arith.constant dense<0.000000e+00> : vector<16xf32>
      %40 = vector.multi_reduction <add>, %39, %cst_27 [1] : vector<16x128xf32> to vector<16xf32>
      %41 = vector.shape_cast %40 : vector<16xf32> to vector<16x1xf32>
      %cst_28 = arith.constant 1.280000e+02 : f32
      %42 = vector.broadcast %cst_28 : f32 to vector<16x1xf32>
      %43 = arith.divf %41, %42 : vector<16x1xf32>
      %cst_29 = arith.constant 9.99999974E-6 : f32
      %44 = vector.broadcast %cst_29 : f32 to vector<16x1xf32>
      %45 = arith.addf %43, %44 : vector<16x1xf32>
      %46 = math.rsqrt %45 : vector<16x1xf32>
      %47 = vector.broadcast %46 : vector<16x1xf32> to vector<16x128xf32>
      %48 = arith.mulf %38, %47 : vector<16x128xf32>
      %c0_30 = arith.constant 0 : index
      %c0_31 = arith.constant 0 : index
      %49 = vector.load %arg3[%c0_30, %c0_31] : memref<1x128xf32, #tpu.memory_space<vmem>>, vector<1x128xf32>
      %50 = vector.broadcast %49 : vector<1x128xf32> to vector<16x128xf32>
      %51 = arith.mulf %48, %50 : vector<16x128xf32>
      %c0_32 = arith.constant 0 : index
      %c0_33 = arith.constant 0 : index
      %52 = vector.load %arg4[%c0_32, %c0_33] : memref<1x128xf32, #tpu.memory_space<vmem>>, vector<1x128xf32>
      %53 = vector.broadcast %52 : vector<1x128xf32> to vector<16x128xf32>
      %54 = arith.addf %51, %53 : vector<16x128xf32>
      %55 = arith.truncf %54 : vector<16x128xf32> to vector<16x128xbf16>
      %c0_34 = arith.constant 0 : index
      %c0_35 = arith.constant 0 : index
      %56 = vector.load %arg12[%c0_34, %c0_35] : memref<16x128xbf16, #tpu.memory_space<vmem>>, vector<16x128xbf16>
      tpu.vector_store %arg12[%c0_34, %c0_35], %55 {strides = array<i32>} : memref<16x128xbf16, #tpu.memory_space<vmem>>, vector<16x128xbf16>,
      %cst_36 = arith.constant 0.000000e+00 : f32
      %57 = vector.broadcast %cst_36 : f32 to vector<16x128xf32>
      %c0_37 = arith.constant 0 : index
      %c0_38 = arith.constant 0 : index
      %58 = vector.load %arg13[%c0_37, %c0_38] : memref<16x128xf32, #tpu.memory_space<vmem>>, vector<16x128xf32>
      tpu.vector_store %arg13[%c0_37, %c0_38], %57 {strides = array<i32>} : memref<16x128xf32, #tpu.memory_space<vmem>>, vector<16x128xf32>,
    } else {
    }
    %c0 = arith.constant 0 : index
    %c0_1 = arith.constant 0 : index
    %3 = vector.load %arg12[%c0, %c0_1] : memref<16x128xbf16, #tpu.memory_space<vmem>>, vector<16x128xbf16>
    %c0_2 = arith.constant 0 : index
    %c0_3 = arith.constant 0 : index
    %4 = vector.load %arg5[%c0_2, %c0_3] : memref<128x512xbf16, #tpu.memory_space<vmem>>, vector<128x512xbf16>
    %cst = arith.constant dense<0.000000e+00> : vector<16x512xf32>
    %5 = tpu.matmul %3, %4, %cst {dimension_numbers = #tpu.dot_dimension_numbers<[1], [0], [0], [1], [0, 0, 1, 1], [], []>} : vector<16x128xbf16>, vector<128x512xbf16>, vector<16x512xf32> -> vector<16x512xf32>
    %c0_4 = arith.constant 0 : index
    %c0_5 = arith.constant 0 : index
    %6 = vector.load %arg6[%c0_4, %c0_5] : memref<1x512xf32, #tpu.memory_space<vmem>>, vector<1x512xf32>
    %7 = vector.broadcast %6 : vector<1x512xf32> to vector<16x512xf32>
    %8 = arith.addf %5, %7 : vector<16x512xf32>
    %c0_6 = arith.constant 0 : index
    %c0_7 = arith.constant 0 : index
    %9 = vector.load %arg7[%c0_6, %c0_7] : memref<128x512xbf16, #tpu.memory_space<vmem>>, vector<128x512xbf16>
    %cst_8 = arith.constant dense<0.000000e+00> : vector<16x512xf32>
    %10 = tpu.matmul %3, %9, %cst_8 {dimension_numbers = #tpu.dot_dimension_numbers<[1], [0], [0], [1], [0, 0, 1, 1], [], []>} : vector<16x128xbf16>, vector<128x512xbf16>, vector<16x512xf32> -> vector<16x512xf32>
    %c0_9 = arith.constant 0 : index
    %c0_10 = arith.constant 0 : index
    %11 = vector.load %arg8[%c0_9, %c0_10] : memref<1x512xf32, #tpu.memory_space<vmem>>, vector<1x512xf32>
    %12 = vector.broadcast %11 : vector<1x512xf32> to vector<16x512xf32>
    %13 = arith.addf %10, %12 : vector<16x512xf32>
    %cst_11 = arith.constant 5.000000e-01 : f32
    %14 = vector.broadcast %cst_11 : f32 to vector<16x512xf32>
    %15 = arith.mulf %14, %13 : vector<16x512xf32>
    %cst_12 = arith.constant 0.707106769 : f32
    %16 = vector.broadcast %cst_12 : f32 to vector<16x512xf32>
    %17 = arith.mulf %13, %16 : vector<16x512xf32>
    %18 = math.erf %17 : vector<16x512xf32>
    %cst_13 = arith.constant 1.000000e+00 : f32
    %19 = vector.broadcast %cst_13 : f32 to vector<16x512xf32>
    %20 = arith.addf %19, %18 : vector<16x512xf32>
    %21 = arith.mulf %15, %20 : vector<16x512xf32>
    %22 = arith.mulf %8, %21 : vector<16x512xf32>
    %23 = arith.truncf %22 : vector<16x512xf32> to vector<16x512xbf16>
    %c0_14 = arith.constant 0 : index
    %c0_15 = arith.constant 0 : index
    %24 = vector.load %arg13[%c0_14, %c0_15] : memref<16x128xf32, #tpu.memory_space<vmem>>, vector<16x128xf32>
    %c0_16 = arith.constant 0 : index
    %c0_17 = arith.constant 0 : index
    %25 = vector.load %arg9[%c0_16, %c0_17] : memref<512x128xbf16, #tpu.memory_space<vmem>>, vector<512x128xbf16>
    %cst_18 = arith.constant dense<0.000000e+00> : vector<16x128xf32>
    %26 = tpu.matmul %23, %25, %cst_18 {dimension_numbers = #tpu.dot_dimension_numbers<[1], [0], [0], [1], [0, 0, 1, 1], [], []>} : vector<16x512xbf16>, vector<512x128xbf16>, vector<16x128xf32> -> vector<16x128xf32>
    %27 = arith.addf %24, %26 : vector<16x128xf32>
    %c0_19 = arith.constant 0 : index
    %c0_20 = arith.constant 0 : index
    %28 = vector.load %arg13[%c0_19, %c0_20] : memref<16x128xf32, #tpu.memory_space<vmem>>, vector<16x128xf32>
    tpu.vector_store %arg13[%c0_19, %c0_20], %27 {strides = array<i32>} : memref<16x128xf32, #tpu.memory_space<vmem>>, vector<16x128xf32>,
    %c0_i32_21 = arith.constant 0 : i32
    %29 = arith.cmpi eq, %arg1, %c0_i32_21 : i32
    %30 = arith.extui %29 : i1 to i32
    %c0_i32_22 = arith.constant 0 : i32
    %31 = arith.cmpi ne, %30, %c0_i32_22 : i32
    scf.if %31 {
      %c0_23 = arith.constant 0 : index
      %c0_24 = arith.constant 0 : index
      %32 = vector.load %arg13[%c0_23, %c0_24] : memref<16x128xf32, #tpu.memory_space<vmem>>, vector<16x128xf32>
      %c0_25 = arith.constant 0 : index
      %c0_26 = arith.constant 0 : index
      %33 = vector.load %arg10[%c0_25, %c0_26] : memref<1x128xf32, #tpu.memory_space<vmem>>, vector<1x128xf32>
      %34 = vector.broadcast %33 : vector<1x128xf32> to vector<16x128xf32>
      %35 = arith.addf %32, %34 : vector<16x128xf32>
      %c0_27 = arith.constant 0 : index
      %c0_28 = arith.constant 0 : index
      %36 = vector.load %arg11[%c0_27, %c0_28] : memref<16x128xf32, #tpu.memory_space<vmem>>, vector<16x128xf32>
      tpu.vector_store %arg11[%c0_27, %c0_28], %35 {strides = array<i32>} : memref<16x128xf32, #tpu.memory_space<vmem>>, vector<16x128xf32>,
    } else {
    }
    return
  }
  func.func @transform_0(%arg0: i32, %arg1: i32) -> (i32, i32) {
    %c0_i32 = arith.constant 0 : i32
    %c0_i32_0 = arith.constant 0 : i32
    return %arg0, %c0_i32 : i32, i32
  }
  func.func @transform_1(%arg0: i32, %arg1: i32) -> (i32, i32) {
    %c0_i32 = arith.constant 0 : i32
    %c0_i32_0 = arith.constant 0 : i32
    %c0_i32_1 = arith.constant 0 : i32
    return %c0_i32, %c0_i32_0 : i32, i32
  }
  func.func @transform_2(%arg0: i32, %arg1: i32) -> (i32, i32) {
    %c0_i32 = arith.constant 0 : i32
    %c0_i32_0 = arith.constant 0 : i32
    %c0_i32_1 = arith.constant 0 : i32
    return %c0_i32, %c0_i32_0 : i32, i32
  }
  func.func @transform_3(%arg0: i32, %arg1: i32) -> (i32, i32) {
    %c0_i32 = arith.constant 0 : i32
    %c0_i32_0 = arith.constant 0 : i32
    return %c0_i32, %arg1 : i32, i32
  }
  func.func @transform_4(%arg0: i32, %arg1: i32) -> (i32, i32) {
    %c0_i32 = arith.constant 0 : i32
    %c0_i32_0 = arith.constant 0 : i32
    return %c0_i32, %arg1 : i32, i32
  }
  func.func @transform_5(%arg0: i32, %arg1: i32) -> (i32, i32) {
    %c0_i32 = arith.constant 0 : i32
    %c0_i32_0 = arith.constant 0 : i32
    return %c0_i32, %arg1 : i32, i32
  }
  func.func @transform_6(%arg0: i32, %arg1: i32) -> (i32, i32) {
    %c0_i32 = arith.constant 0 : i32
    %c0_i32_0 = arith.constant 0 : i32
    return %c0_i32, %arg1 : i32, i32
  }
  func.func @transform_7(%arg0: i32, %arg1: i32) -> (i32, i32) {
    %c0_i32 = arith.constant 0 : i32
    %c0_i32_0 = arith.constant 0 : i32
    return %arg1, %c0_i32 : i32, i32
  }
  func.func @transform_8(%arg0: i32, %arg1: i32) -> (i32, i32) {
    %c0_i32 = arith.constant 0 : i32
    %c0_i32_0 = arith.constant 0 : i32
    %c0_i32_1 = arith.constant 0 : i32
    return %c0_i32, %c0_i32_0 : i32, i32
  }
  func.func @transform_9(%arg0: i32, %arg1: i32) -> (i32, i32) {
    %c0_i32 = arith.constant 0 : i32
    %c0_i32_0 = arith.constant 0 : i32
    return %arg0, %c0_i32 : i32, i32
  }
}

</mosaic_0001>

<llo_original>
// kernel: feedforward.1
$region0: #{feedforward.1}
  #allocation0 [shape = 'u32[]', space=smem, size = 0x4, offset = 0x4, fixed_abs, tag = 'smem constant byte address 0x4 - core index']
  #allocation1 [shape = 'u32[72,128]{1,0:T(1,128)}', space=vmem, size = 0x9000, scoped, tag = 'internal scratch']
  #allocation2 [shape = 'bf16[16,128]{1,0:T(8,128)(2,1)}', space=vmem, size = 0x1000, scoped, tag = 'scratch operand']
  #allocation3 [shape = 'f32[16,128]{1,0:T(8,128)}', space=vmem, size = 0x2000, scoped, tag = 'scratch operand']
  %s0 = inlined_call_operand.hbm [shape: f32[16,128], index: 0, kind: input, shape index: {}]
  %s1 = inlined_call_operand.vmem [shape: f32[1,128], index: 1, kind: input, shape index: {}]
  %s2 = inlined_call_operand.vmem [shape: f32[1,128], index: 2, kind: input, shape index: {}]
  %s3 = inlined_call_operand.hbm [shape: bf16[128,512], index: 3, kind: input, shape index: {}]
  %s4 = inlined_call_operand.hbm [shape: f32[1,512], index: 4, kind: input, shape index: {}]
  %s5 = inlined_call_operand.hbm [shape: bf16[128,512], index: 5, kind: input, shape index: {}]
  %s6 = inlined_call_operand.hbm [shape: f32[1,512], index: 6, kind: input, shape index: {}]
  %s7 = inlined_call_operand.hbm [shape: bf16[512,128], index: 7, kind: input, shape index: {}]
  %s8 = inlined_call_operand.vmem [shape: f32[1,128], index: 8, kind: input, shape index: {}]
  %s9 = inlined_call_operand.hbm [shape: f32[16,128], index: 9, kind: output, shape index: {}]
  %s10 = sld [smem:[#allocation0]]
  $region78: #{feedforward.1} parent=0
    _
  %s12 = ssub.s32 1, %s10
  %s13 = scalar_select 0, %s12, %s10
  $region1: #{feedforward.1} parent=0
    #allocation4 [shape = 'u8[8192]{0}', space=vmem, size = 0x2000, scoped, tag = 'input window, operand 0, single buffered']
    #allocation5 [shape = 's32[1]{0}', space=sflag, size = 0x4, scoped, tag = 'scoped memory for feedforward.1']
    #allocation6 [shape = 's32[1]{0}', space=sflag, size = 0x4, scoped, tag = 'scoped memory for feedforward.1']
    #allocation7 [shape = 'u8[131072]{0}', space=vmem, size = 0x20000, scoped, tag = 'input window, operand 3, single buffered']
    #allocation8 [shape = 's32[1]{0}', space=sflag, size = 0x4, scoped, tag = 'scoped memory for feedforward.1']
    #allocation9 [shape = 'u8[2048]{0}', space=vmem, size = 0x800, scoped, tag = 'input window, operand 4, single buffered']
    #allocation10 [shape = 'u8[131072]{0}', space=vmem, size = 0x20000, scoped, tag = 'input window, operand 5, single buffered']
    #allocation11 [shape = 's32[1]{0}', space=sflag, size = 0x4, scoped, tag = 'scoped memory for feedforward.1']
    #allocation12 [shape = 'u8[2048]{0}', space=vmem, size = 0x800, scoped, tag = 'input window, operand 6, single buffered']
    #allocation13 [shape = 'u8[131072]{0}', space=vmem, size = 0x20000, scoped, tag = 'input window, operand 7, single buffered']
    #allocation14 [shape = 's32[1]{0}', space=sflag, size = 0x4, scoped, tag = 'scoped memory for feedforward.1']
    #allocation15 [shape = 'u8[8192]{0}', space=vmem, size = 0x2000, scoped, tag = 'output window, operand 0, single buffered']
    %14 = vsyncpa [#allocation5], 0
    %15 = vsyncpa [#allocation8], 0
    %16 = vsyncpa [#allocation11], 0
    %17 = vsyncpa [#allocation14], 0
    %18 = vsyncpa [#allocation6], 0
    // Predicated region
    $region2: #{feedforward.1} parent=1 // pred_check
      _
    $region3: #{feedforward.1} parent=1 // pred_check_branch
      %20 = sbr.rel (0) target = $region5
    $region4: #{feedforward.1} parent=1 // pred_region
      %22 = vsyncadd [#allocation5], 0
      %s23 = sshll.u32 %s0, 4
      %s24 = int_to_ptr.hbm [resolvable:$true] %s23
      %s25 = sshll.u32 [#allocation4], 4
      %s26 = int_to_ptr.vmem [resolvable:$true] %s25
      %31 = dma.hbm_to_vmem [thread:$0]  %s24, 256, %s26, [#allocation5], 128, 128, 8
    $region5: #{feedforward.1} parent=1 // pred_fallthru
      _
    // Predicated region
    $region6: #{feedforward.1} parent=1 // pred_check
      _
    $region7: #{feedforward.1} parent=1 // pred_check_branch
      %33 = sbr.rel (0) target = $region9
    $region8: #{feedforward.1} parent=1 // pred_region
      _
    $region9: #{feedforward.1} parent=1 // pred_fallthru
      _
    // Predicated region
    $region10: #{feedforward.1} parent=1 // pred_check
      _
    $region11: #{feedforward.1} parent=1 // pred_check_branch
      %35 = sbr.rel (0) target = $region13
    $region12: #{feedforward.1} parent=1 // pred_region
      _
    $region13: #{feedforward.1} parent=1 // pred_fallthru
      _
    // Predicated region
    $region14: #{feedforward.1} parent=1 // pred_check
      _
    $region15: #{feedforward.1} parent=1 // pred_check_branch
      %37 = sbr.rel (0) target = $region17
    $region16: #{feedforward.1} parent=1 // pred_region
      %39 = vsyncadd [#allocation8], 0
      %s40 = sshll.u32 %s3, 4
      %s41 = int_to_ptr.hbm [resolvable:$true] %s40
      %s42 = sshll.u32 [#allocation7], 4
      %s43 = int_to_ptr.vmem [resolvable:$true] %s42
      %48 = dma.hbm_to_vmem [thread:$0]  %s41, 4096, %s43, [#allocation8], 256, 256, 16
    $region17: #{feedforward.1} parent=1 // pred_fallthru
      _
    // Predicated region
    $region18: #{feedforward.1} parent=1 // pred_check
      _
    $region19: #{feedforward.1} parent=1 // pred_check_branch
      %50 = sbr.rel (0) target = $region21
    $region20: #{feedforward.1} parent=1 // pred_region
      %52 = vsyncadd [#allocation8], 0
      %s54 = sshll.u32 %s4, 4
      %s55 = int_to_ptr.hbm [resolvable:$true] %s54
      %s56 = sshll.u32 [#allocation9], 4
      %s57 = int_to_ptr.vmem [resolvable:$true] %s56
      %59 = dma.hbm_to_vmem [thread:$0]  %s55, 64, %s57, [#allocation8]
    $region21: #{feedforward.1} parent=1 // pred_fallthru
      _
    // Predicated region
    $region22: #{feedforward.1} parent=1 // pred_check
      _
    $region23: #{feedforward.1} parent=1 // pred_check_branch
      %61 = sbr.rel (0) target = $region25
    $region24: #{feedforward.1} parent=1 // pred_region
      %63 = vsyncadd [#allocation11], 0
      %s64 = sshll.u32 %s5, 4
      %s65 = int_to_ptr.hbm [resolvable:$true] %s64
      %s66 = sshll.u32 [#allocation10], 4
      %s67 = int_to_ptr.vmem [resolvable:$true] %s66
      %72 = dma.hbm_to_vmem [thread:$0]  %s65, 4096, %s67, [#allocation11], 256, 256, 16
    $region25: #{feedforward.1} parent=1 // pred_fallthru
      _
    // Predicated region
    $region26: #{feedforward.1} parent=1 // pred_check
      _
    $region27: #{feedforward.1} parent=1 // pred_check_branch
      %74 = sbr.rel (0) target = $region29
    $region28: #{feedforward.1} parent=1 // pred_region
      %76 = vsyncadd [#allocation11], 0
      %s78 = sshll.u32 %s6, 4
      %s79 = int_to_ptr.hbm [resolvable:$true] %s78
      %s80 = sshll.u32 [#allocation12], 4
      %s81 = int_to_ptr.vmem [resolvable:$true] %s80
      %83 = dma.hbm_to_vmem [thread:$0]  %s79, 64, %s81, [#allocation11]
    $region29: #{feedforward.1} parent=1 // pred_fallthru
      _
    // Predicated region
    $region30: #{feedforward.1} parent=1 // pred_check
      _
    $region31: #{feedforward.1} parent=1 // pred_check_branch
      %85 = sbr.rel (0) target = $region33
    $region32: #{feedforward.1} parent=1 // pred_region
      %87 = vsyncadd [#allocation14], 0
      %s88 = sshll.u32 %s7, 4
      %s89 = int_to_ptr.hbm [resolvable:$true] %s88
      %s90 = sshll.u32 [#allocation13], 4
      %s91 = int_to_ptr.vmem [resolvable:$true] %s90
      %96 = dma.hbm_to_vmem [thread:$0]  %s89, 4096, %s91, [#allocation14], 64, 64, 4
    $region33: #{feedforward.1} parent=1 // pred_fallthru
      _
    // Predicated region
    $region34: #{feedforward.1} parent=1 // pred_check
      _
    $region35: #{feedforward.1} parent=1 // pred_check_branch
      %98 = sbr.rel (0) target = $region37
    $region36: #{feedforward.1} parent=1 // pred_region
      _
    $region37: #{feedforward.1} parent=1 // pred_fallthru
      _
    // Predicated region
    $region38: #{feedforward.1} parent=1 // pred_check
      _
    $region39: #{feedforward.1} parent=1 // pred_check_branch
      %100 = sbr.rel (0) target = $region41
    $region40: #{feedforward.1} parent=1 // pred_region
      %102 = dma.done [#allocation5], 256
    $region41: #{feedforward.1} parent=1 // pred_fallthru
      _
    // Predicated region
    $region42: #{feedforward.1} parent=1 // pred_check
      _
    $region43: #{feedforward.1} parent=1 // pred_check_branch
      %104 = sbr.rel (0) target = $region45
    $region44: #{feedforward.1} parent=1 // pred_region
      %106 = dma.done [#allocation8], 4096
    $region45: #{feedforward.1} parent=1 // pred_fallthru
      _
    // Predicated region
    $region46: #{feedforward.1} parent=1 // pred_check
      _
    $region47: #{feedforward.1} parent=1 // pred_check_branch
      %108 = sbr.rel (0) target = $region49
    $region48: #{feedforward.1} parent=1 // pred_region
      %110 = dma.done [#allocation8], 64
    $region49: #{feedforward.1} parent=1 // pred_fallthru
      _
    // Predicated region
    $region50: #{feedforward.1} parent=1 // pred_check
      _
    $region51: #{feedforward.1} parent=1 // pred_check_branch
      %112 = sbr.rel (0) target = $region53
    $region52: #{feedforward.1} parent=1 // pred_region
      %114 = dma.done [#allocation11], 4096
    $region53: #{feedforward.1} parent=1 // pred_fallthru
      _
    // Predicated region
    $region54: #{feedforward.1} parent=1 // pred_check
      _
    $region55: #{feedforward.1} parent=1 // pred_check_branch
      %116 = sbr.rel (0) target = $region57
    $region56: #{feedforward.1} parent=1 // pred_region
      %118 = dma.done [#allocation11], 64
    $region57: #{feedforward.1} parent=1 // pred_fallthru
      _
    // Predicated region
    $region58: #{feedforward.1} parent=1 // pred_check
      _
    $region59: #{feedforward.1} parent=1 // pred_check_branch
      %120 = sbr.rel (0) target = $region61
    $region60: #{feedforward.1} parent=1 // pred_region
      %122 = dma.done [#allocation14], 4096
    $region61: #{feedforward.1} parent=1 // pred_fallthru
      _
    %p123 = scmp.eq.s32.totalorder 0, 0
    // Predicated region
    $region62: #{feedforward.1} parent=1 // pred_check
      %p124 = pneg %p123
    $region63: #{feedforward.1} parent=1 // pred_check_branch
      %126 = sbr.rel (%p124) target = $region65
    $region64: #{feedforward.1} parent=1 // pred_region
      %v127 = vld [vmem:[#allocation4] sm:$0xff]
      %v128 = vld [vmem:[#allocation4 + $0x8] sm:$0xff]
      %129 = vadd.xlane.f32.xlu0 %v127
      %v130 = vpop.xlane.xlu0 %129
      %131 = vadd.xlane.f32.xlu0 %v128
      %v132 = vpop.xlane.xlu0 %131
      %v133 = vrcp.pop 128.0
      %v134 = vmul.f32 128.0, %v133
      %v135 = vsub.f32 1.0, %v134
      %v136 = vmul.f32 %v133, %v135
      %v137 = vadd.f32 %v133, %v136
      %vm138 = vweird.f32 %v133
      %v139 = vsel %vm138, %v133, %v137
      %v140 = vmul.f32 %v130, %v139
      %v141 = vmul.f32 %v132, %v139
      %v142 = vsub.f32 %v127, %v140
      %v143 = vsub.f32 %v128, %v141
      %v144 = vmul.f32 %v142, %v142
      %v145 = vmul.f32 %v143, %v143
      %146 = vadd.xlane.f32.xlu0 %v144
      %v147 = vpop.xlane.xlu0 %146
      %148 = vadd.xlane.f32.xlu0 %v145
      %v149 = vpop.xlane.xlu0 %148
      %v150 = vmul.f32 %v147, %v139
      %v151 = vmul.f32 %v149, %v139
      %v152 = vadd.f32 %v150, 1e-05
      %v153 = vadd.f32 %v151, 1e-05
      %v154 = vrsqrt.pop %v152
      %v155 = vmul.f32 %v154, %v152
      %v156 = vmul.f32 %v155, %v154
      %v157 = vmul.f32 0.5, %v156
      %v158 = vsub.f32 1.5, %v157
      %v159 = vmul.f32 %v154, %v158
      %vm160 = vweird.f32 %v152
      %vm161 = vweird.f32 %v154
      %vm162 = vmor %vm160, %vm161
      %v163 = vsel %vm162, %v154, %v159
      %v164 = vrsqrt.pop %v153
      %v165 = vmul.f32 %v164, %v153
      %v166 = vmul.f32 %v165, %v164
      %v167 = vmul.f32 0.5, %v166
      %v168 = vsub.f32 1.5, %v167
      %v169 = vmul.f32 %v164, %v168
      %vm170 = vweird.f32 %v153
      %vm171 = vweird.f32 %v164
      %vm172 = vmor %vm170, %vm171
      %v173 = vsel %vm172, %v164, %v169
      %v174 = vmul.f32 %v142, %v163
      %v175 = vmul.f32 %v143, %v173
      %v176 = vld [vmem:[%s1] sm:$0x1]
      %v178 = vperm.slane %v176, 0
      %v180 = vmul.f32 %v174, %v178
      %v181 = vmul.f32 %v175, %v178
      %v182 = vld [vmem:[%s2] sm:$0x1]
      %v184 = vperm.slane %v182, 0
      %v186 = vadd.f32 %v180, %v184
      %v187 = vadd.f32 %v181, %v184
      %v188 = vpack.c.bf16 %v186, %v186
      %v189 = vpack.c.bf16 %v187, %v187
      %190 = vst [vmem:[#allocation2] sm:$0xf] %v188
      %191 = vst [vmem:[#allocation2 + $0x4] sm:$0xf] %v189
      %192 = vst [vmem:[#allocation3] sm:$0xff] 0.0
      %193 = vst [vmem:[#allocation3 + $0x8] sm:$0xff] 0.0
    $region65: #{feedforward.1} parent=1 // pred_fallthru
      _
    %v194 = vld [vmem:[#allocation2] sm:$0xf]
    %v195 = vld [vmem:[#allocation2 + $0x4] sm:$0xf]
    %v196 = vld [vmem:[#allocation7] sm:$0xff]
    %v197 = vld [vmem:[#allocation7 + $0x8] sm:$0xff]
    %v198 = vld [vmem:[#allocation7 + $0x10] sm:$0xff]
    %v199 = vld [vmem:[#allocation7 + $0x18] sm:$0xff]
    %v200 = vld [vmem:[#allocation7 + $0x20] sm:$0xff]
    %v201 = vld [vmem:[#allocation7 + $0x28] sm:$0xff]
    %v202 = vld [vmem:[#allocation7 + $0x30] sm:$0xff]
    %v203 = vld [vmem:[#allocation7 + $0x38] sm:$0xff]
    %v204 = vld [vmem:[#allocation7 + $0x40] sm:$0xff]
    %v205 = vld [vmem:[#allocation7 + $0x48] sm:$0xff]
    %v206 = vld [vmem:[#allocation7 + $0x50] sm:$0xff]
    %v207 = vld [vmem:[#allocation7 + $0x58] sm:$0xff]
    %v208 = vld [vmem:[#allocation7 + $0x60] sm:$0xff]
    %v209 = vld [vmem:[#allocation7 + $0x68] sm:$0xff]
    %v210 = vld [vmem:[#allocation7 + $0x70] sm:$0xff]
    %v211 = vld [vmem:[#allocation7 + $0x78] sm:$0xff]
    %v212 = vld [vmem:[#allocation7 + $0x80] sm:$0xff]
    %v213 = vld [vmem:[#allocation7 + $0x88] sm:$0xff]
    %v214 = vld [vmem:[#allocation7 + $0x90] sm:$0xff]
    %v215 = vld [vmem:[#allocation7 + $0x98] sm:$0xff]
    %v216 = vld [vmem:[#allocation7 + $0xa0] sm:$0xff]
    %v217 = vld [vmem:[#allocation7 + $0xa8] sm:$0xff]
    %v218 = vld [vmem:[#allocation7 + $0xb0] sm:$0xff]
    %v219 = vld [vmem:[#allocation7 + $0xb8] sm:$0xff]
    %v220 = vld [vmem:[#allocation7 + $0xc0] sm:$0xff]
    %v221 = vld [vmem:[#allocation7 + $0xc8] sm:$0xff]
    %v222 = vld [vmem:[#allocation7 + $0xd0] sm:$0xff]
    %v223 = vld [vmem:[#allocation7 + $0xd8] sm:$0xff]
    %v224 = vld [vmem:[#allocation7 + $0xe0] sm:$0xff]
    %v225 = vld [vmem:[#allocation7 + $0xe8] sm:$0xff]
    %v226 = vld [vmem:[#allocation7 + $0xf0] sm:$0xff]
    %v227 = vld [vmem:[#allocation7 + $0xf8] sm:$0xff]
    %v228 = vld [vmem:[#allocation9] sm:$0xf]
    %v230 = vperm.slane %v228, 0
    %v231 = vperm.slane %v228, 1
    %v232 = vperm.slane %v228, 2
    %v233 = vperm.slane %v228, 3
    %v240 = vunpack.c.l.b16 %v194
    %v241 = vunpack.c.l.b16 %v195
    %v242 = vpack.c.b16 %v241, %v240
    %v276 = vunpack.c.l.b16 %v196
    %v277 = vunpack.c.h.b16 %v196
    %v278 = vunpack.c.l.b16 %v197
    %v279 = vunpack.c.h.b16 %v197
    %v280 = vunpack.c.l.b16 %v198
    %v281 = vunpack.c.h.b16 %v198
    %v282 = vunpack.c.l.b16 %v199
    %v283 = vunpack.c.h.b16 %v199
    %v284 = vunpack.c.l.b16 %v200
    %v285 = vunpack.c.h.b16 %v200
    %v286 = vunpack.c.l.b16 %v201
    %v287 = vunpack.c.h.b16 %v201
    %v288 = vunpack.c.l.b16 %v202
    %v289 = vunpack.c.h.b16 %v202
    %v290 = vunpack.c.l.b16 %v203
    %v291 = vunpack.c.h.b16 %v203
    %v292 = vunpack.c.l.b16 %v204
    %v293 = vunpack.c.h.b16 %v204
    %v294 = vunpack.c.l.b16 %v205
    %v295 = vunpack.c.h.b16 %v205
    %v296 = vunpack.c.l.b16 %v206
    %v297 = vunpack.c.h.b16 %v206
    %v298 = vunpack.c.l.b16 %v207
    %v299 = vunpack.c.h.b16 %v207
    %v300 = vunpack.c.l.b16 %v208
    %v301 = vunpack.c.h.b16 %v208
    %v302 = vunpack.c.l.b16 %v209
    %v303 = vunpack.c.h.b16 %v209
    %v304 = vunpack.c.l.b16 %v210
    %v305 = vunpack.c.h.b16 %v210
    %v306 = vunpack.c.l.b16 %v211
    %v307 = vunpack.c.h.b16 %v211
    %v308 = vunpack.c.l.b16 %v212
    %v309 = vunpack.c.h.b16 %v212
    %v310 = vunpack.c.l.b16 %v213
    %v311 = vunpack.c.h.b16 %v213
    %v312 = vunpack.c.l.b16 %v214
    %v313 = vunpack.c.h.b16 %v214
    %v314 = vunpack.c.l.b16 %v215
    %v315 = vunpack.c.h.b16 %v215
    %v316 = vunpack.c.l.b16 %v216
    %v317 = vunpack.c.h.b16 %v216
    %v318 = vunpack.c.l.b16 %v217
    %v319 = vunpack.c.h.b16 %v217
    %v320 = vunpack.c.l.b16 %v218
    %v321 = vunpack.c.h.b16 %v218
    %v322 = vunpack.c.l.b16 %v219
    %v323 = vunpack.c.h.b16 %v219
    %v324 = vunpack.c.l.b16 %v220
    %v325 = vunpack.c.h.b16 %v220
    %v326 = vunpack.c.l.b16 %v221
    %v327 = vunpack.c.h.b16 %v221
    %v328 = vunpack.c.l.b16 %v222
    %v329 = vunpack.c.h.b16 %v222
    %v330 = vunpack.c.l.b16 %v223
    %v331 = vunpack.c.h.b16 %v223
    %v332 = vunpack.c.l.b16 %v224
    %v333 = vunpack.c.h.b16 %v224
    %v334 = vunpack.c.l.b16 %v225
    %v335 = vunpack.c.h.b16 %v225
    %v336 = vunpack.c.l.b16 %v226
    %v337 = vunpack.c.h.b16 %v226
    %v338 = vunpack.c.l.b16 %v227
    %v339 = vunpack.c.h.b16 %v227
    %v340 = vpack.c.b16 %v280, %v276
    %v341 = vpack.c.b16 %v281, %v277
    %v342 = vpack.c.b16 %v282, %v278
    %v343 = vpack.c.b16 %v283, %v279
    %v344 = vpack.c.b16 %v288, %v284
    %v345 = vpack.c.b16 %v289, %v285
    %v346 = vpack.c.b16 %v290, %v286
    %v347 = vpack.c.b16 %v291, %v287
    %v348 = vpack.c.b16 %v296, %v292
    %v349 = vpack.c.b16 %v297, %v293
    %v350 = vpack.c.b16 %v298, %v294
    %v351 = vpack.c.b16 %v299, %v295
    %v352 = vpack.c.b16 %v304, %v300
    %v353 = vpack.c.b16 %v305, %v301
    %v354 = vpack.c.b16 %v306, %v302
    %v355 = vpack.c.b16 %v307, %v303
    %v356 = vpack.c.b16 %v312, %v308
    %v357 = vpack.c.b16 %v313, %v309
    %v358 = vpack.c.b16 %v314, %v310
    %v359 = vpack.c.b16 %v315, %v311
    %v360 = vpack.c.b16 %v320, %v316
    %v361 = vpack.c.b16 %v321, %v317
    %v362 = vpack.c.b16 %v322, %v318
    %v363 = vpack.c.b16 %v323, %v319
    %v364 = vpack.c.b16 %v328, %v324
    %v365 = vpack.c.b16 %v329, %v325
    %v366 = vpack.c.b16 %v330, %v326
    %v367 = vpack.c.b16 %v331, %v327
    %v368 = vpack.c.b16 %v336, %v332
    %v369 = vpack.c.b16 %v337, %v333
    %v370 = vpack.c.b16 %v338, %v334
    %v371 = vpack.c.b16 %v339, %v335
    %404 = vmatpush.bf16.msra.mxu0 %v368
    %405 = vmatpush.bf16.msra.mxu0 %v364
    %406 = vmatpush.bf16.msra.mxu0 %v360
    %407 = vmatpush.bf16.msra.mxu0 %v356
    %408 = vmatpush.bf16.msra.mxu0 %v352
    %409 = vmatpush.bf16.msra.mxu0 %v348
    %410 = vmatpush.bf16.msra.mxu0 %v344
    %411 = vmatpush.bf16.msra.mxu0 %v340
    %412 = vmatmul.bf16.gmra.mxu0 %v242
    %v413 = vpop.f32.mrf.mxu0
    %v414 = vadd.f32 %v230, %v413
    %v415 = vpop.f32.mrf.mxu0
    %v416 = vadd.f32 %v230, %v415
    %417 = vdwg.mxu0
    %418 = vmatpush.bf16.msra.mxu0 %v369
    %419 = vmatpush.bf16.msra.mxu0 %v365
    %420 = vmatpush.bf16.msra.mxu0 %v361
    %421 = vmatpush.bf16.msra.mxu0 %v357
    %422 = vmatpush.bf16.msra.mxu0 %v353
    %423 = vmatpush.bf16.msra.mxu0 %v349
    %424 = vmatpush.bf16.msra.mxu0 %v345
    %425 = vmatpush.bf16.msra.mxu0 %v341
    %426 = vmatmul.bf16.gmra.mxu0 %v242
    %v427 = vpop.f32.mrf.mxu0
    %v428 = vadd.f32 %v231, %v427
    %v429 = vpop.f32.mrf.mxu0
    %v430 = vadd.f32 %v231, %v429
    %431 = vdwg.mxu0
    %432 = vmatpush.bf16.msra.mxu0 %v370
    %433 = vmatpush.bf16.msra.mxu0 %v366
    %434 = vmatpush.bf16.msra.mxu0 %v362
    %435 = vmatpush.bf16.msra.mxu0 %v358
    %436 = vmatpush.bf16.msra.mxu0 %v354
    %437 = vmatpush.bf16.msra.mxu0 %v350
    %438 = vmatpush.bf16.msra.mxu0 %v346
    %439 = vmatpush.bf16.msra.mxu0 %v342
    %440 = vmatmul.bf16.gmra.mxu0 %v242
    %v441 = vpop.f32.mrf.mxu0
    %v442 = vadd.f32 %v232, %v441
    %v443 = vpop.f32.mrf.mxu0
    %v444 = vadd.f32 %v232, %v443
    %445 = vdwg.mxu0
    %446 = vmatpush.bf16.msra.mxu0 %v371
    %447 = vmatpush.bf16.msra.mxu0 %v367
    %448 = vmatpush.bf16.msra.mxu0 %v363
    %449 = vmatpush.bf16.msra.mxu0 %v359
    %450 = vmatpush.bf16.msra.mxu0 %v355
    %451 = vmatpush.bf16.msra.mxu0 %v351
    %452 = vmatpush.bf16.msra.mxu0 %v347
    %453 = vmatpush.bf16.msra.mxu0 %v343
    %454 = vmatmul.bf16.gmra.mxu0 %v242
    %v455 = vpop.f32.mrf.mxu0
    %v456 = vadd.f32 %v233, %v455
    %v457 = vpop.f32.mrf.mxu0
    %v458 = vadd.f32 %v233, %v457
    %459 = vdwg.mxu0
    %v460 = vld [vmem:[#allocation10] sm:$0xff]
    %v461 = vld [vmem:[#allocation10 + $0x8] sm:$0xff]
    %v462 = vld [vmem:[#allocation10 + $0x10] sm:$0xff]
    %v463 = vld [vmem:[#allocation10 + $0x18] sm:$0xff]
    %v464 = vld [vmem:[#allocation10 + $0x20] sm:$0xff]
    %v465 = vld [vmem:[#allocation10 + $0x28] sm:$0xff]
    %v466 = vld [vmem:[#allocation10 + $0x30] sm:$0xff]
    %v467 = vld [vmem:[#allocation10 + $0x38] sm:$0xff]
    %v468 = vld [vmem:[#allocation10 + $0x40] sm:$0xff]
    %v469 = vld [vmem:[#allocation10 + $0x48] sm:$0xff]
    %v470 = vld [vmem:[#allocation10 + $0x50] sm:$0xff]
    %v471 = vld [vmem:[#allocation10 + $0x58] sm:$0xff]
    %v472 = vld [vmem:[#allocation10 + $0x60] sm:$0xff]
    %v473 = vld [vmem:[#allocation10 + $0x68] sm:$0xff]
    %v474 = vld [vmem:[#allocation10 + $0x70] sm:$0xff]
    %v475 = vld [vmem:[#allocation10 + $0x78] sm:$0xff]
    %v476 = vld [vmem:[#allocation10 + $0x80] sm:$0xff]
    %v477 = vld [vmem:[#allocation10 + $0x88] sm:$0xff]
    %v478 = vld [vmem:[#allocation10 + $0x90] sm:$0xff]
    %v479 = vld [vmem:[#allocation10 + $0x98] sm:$0xff]
    %v480 = vld [vmem:[#allocation10 + $0xa0] sm:$0xff]
    %v481 = vld [vmem:[#allocation10 + $0xa8] sm:$0xff]
    %v482 = vld [vmem:[#allocation10 + $0xb0] sm:$0xff]
    %v483 = vld [vmem:[#allocation10 + $0xb8] sm:$0xff]
    %v484 = vld [vmem:[#allocation10 + $0xc0] sm:$0xff]
    %v485 = vld [vmem:[#allocation10 + $0xc8] sm:$0xff]
    %v486 = vld [vmem:[#allocation10 + $0xd0] sm:$0xff]
    %v487 = vld [vmem:[#allocation10 + $0xd8] sm:$0xff]
    %v488 = vld [vmem:[#allocation10 + $0xe0] sm:$0xff]
    %v489 = vld [vmem:[#allocation10 + $0xe8] sm:$0xff]
    %v490 = vld [vmem:[#allocation10 + $0xf0] sm:$0xff]
    %v491 = vld [vmem:[#allocation10 + $0xf8] sm:$0xff]
    %v492 = vld [vmem:[#allocation12] sm:$0xf]
    %v494 = vperm.slane %v492, 0
    %v495 = vperm.slane %v492, 1
    %v496 = vperm.slane %v492, 2
    %v497 = vperm.slane %v492, 3
    %v534 = vunpack.c.l.b16 %v460
    %v535 = vunpack.c.h.b16 %v460
    %v536 = vunpack.c.l.b16 %v461
    %v537 = vunpack.c.h.b16 %v461
    %v538 = vunpack.c.l.b16 %v462
    %v539 = vunpack.c.h.b16 %v462
    %v540 = vunpack.c.l.b16 %v463
    %v541 = vunpack.c.h.b16 %v463
    %v542 = vunpack.c.l.b16 %v464
    %v543 = vunpack.c.h.b16 %v464
    %v544 = vunpack.c.l.b16 %v465
    %v545 = vunpack.c.h.b16 %v465
    %v546 = vunpack.c.l.b16 %v466
    %v547 = vunpack.c.h.b16 %v466
    %v548 = vunpack.c.l.b16 %v467
    %v549 = vunpack.c.h.b16 %v467
    %v550 = vunpack.c.l.b16 %v468
    %v551 = vunpack.c.h.b16 %v468
    %v552 = vunpack.c.l.b16 %v469
    %v553 = vunpack.c.h.b16 %v469
    %v554 = vunpack.c.l.b16 %v470
    %v555 = vunpack.c.h.b16 %v470
    %v556 = vunpack.c.l.b16 %v471
    %v557 = vunpack.c.h.b16 %v471
    %v558 = vunpack.c.l.b16 %v472
    %v559 = vunpack.c.h.b16 %v472
    %v560 = vunpack.c.l.b16 %v473
    %v561 = vunpack.c.h.b16 %v473
    %v562 = vunpack.c.l.b16 %v474
    %v563 = vunpack.c.h.b16 %v474
    %v564 = vunpack.c.l.b16 %v475
    %v565 = vunpack.c.h.b16 %v475
    %v566 = vunpack.c.l.b16 %v476
    %v567 = vunpack.c.h.b16 %v476
    %v568 = vunpack.c.l.b16 %v477
    %v569 = vunpack.c.h.b16 %v477
    %v570 = vunpack.c.l.b16 %v478
    %v571 = vunpack.c.h.b16 %v478
    %v572 = vunpack.c.l.b16 %v479
    %v573 = vunpack.c.h.b16 %v479
    %v574 = vunpack.c.l.b16 %v480
    %v575 = vunpack.c.h.b16 %v480
    %v576 = vunpack.c.l.b16 %v481
    %v577 = vunpack.c.h.b16 %v481
    %v578 = vunpack.c.l.b16 %v482
    %v579 = vunpack.c.h.b16 %v482
    %v580 = vunpack.c.l.b16 %v483
    %v581 = vunpack.c.h.b16 %v483
    %v582 = vunpack.c.l.b16 %v484
    %v583 = vunpack.c.h.b16 %v484
    %v584 = vunpack.c.l.b16 %v485
    %v585 = vunpack.c.h.b16 %v485
    %v586 = vunpack.c.l.b16 %v486
    %v587 = vunpack.c.h.b16 %v486
    %v588 = vunpack.c.l.b16 %v487
    %v589 = vunpack.c.h.b16 %v487
    %v590 = vunpack.c.l.b16 %v488
    %v591 = vunpack.c.h.b16 %v488
    %v592 = vunpack.c.l.b16 %v489
    %v593 = vunpack.c.h.b16 %v489
    %v594 = vunpack.c.l.b16 %v490
    %v595 = vunpack.c.h.b16 %v490
    %v596 = vunpack.c.l.b16 %v491
    %v597 = vunpack.c.h.b16 %v491
    %v598 = vpack.c.b16 %v538, %v534
    %v599 = vpack.c.b16 %v539, %v535
    %v600 = vpack.c.b16 %v540, %v536
    %v601 = vpack.c.b16 %v541, %v537
    %v602 = vpack.c.b16 %v546, %v542
    %v603 = vpack.c.b16 %v547, %v543
    %v604 = vpack.c.b16 %v548, %v544
    %v605 = vpack.c.b16 %v549, %v545
    %v606 = vpack.c.b16 %v554, %v550
    %v607 = vpack.c.b16 %v555, %v551
    %v608 = vpack.c.b16 %v556, %v552
    %v609 = vpack.c.b16 %v557, %v553
    %v610 = vpack.c.b16 %v562, %v558
    %v611 = vpack.c.b16 %v563, %v559
    %v612 = vpack.c.b16 %v564, %v560
    %v613 = vpack.c.b16 %v565, %v561
    %v614 = vpack.c.b16 %v570, %v566
    %v615 = vpack.c.b16 %v571, %v567
    %v616 = vpack.c.b16 %v572, %v568
    %v617 = vpack.c.b16 %v573, %v569
    %v618 = vpack.c.b16 %v578, %v574
    %v619 = vpack.c.b16 %v579, %v575
    %v620 = vpack.c.b16 %v580, %v576
    %v621 = vpack.c.b16 %v581, %v577
    %v622 = vpack.c.b16 %v586, %v582
    %v623 = vpack.c.b16 %v587, %v583
    %v624 = vpack.c.b16 %v588, %v584
    %v625 = vpack.c.b16 %v589, %v585
    %v626 = vpack.c.b16 %v594, %v590
    %v627 = vpack.c.b16 %v595, %v591
    %v628 = vpack.c.b16 %v596, %v592
    %v629 = vpack.c.b16 %v597, %v593
    %662 = vmatpush.bf16.msra.mxu0 %v626
    %663 = vmatpush.bf16.msra.mxu0 %v622
    %664 = vmatpush.bf16.msra.mxu0 %v618
    %665 = vmatpush.bf16.msra.mxu0 %v614
    %666 = vmatpush.bf16.msra.mxu0 %v610
    %667 = vmatpush.bf16.msra.mxu0 %v606
    %668 = vmatpush.bf16.msra.mxu0 %v602
    %669 = vmatpush.bf16.msra.mxu0 %v598
    %670 = vmatmul.bf16.gmra.mxu0 %v242
    %v671 = vpop.f32.mrf.mxu0
    %v672 = vadd.f32 %v494, %v671
    %v673 = vpop.f32.mrf.mxu0
    %v674 = vadd.f32 %v494, %v673
    %675 = vdwg.mxu0
    %676 = vmatpush.bf16.msra.mxu0 %v627
    %677 = vmatpush.bf16.msra.mxu0 %v623
    %678 = vmatpush.bf16.msra.mxu0 %v619
    %679 = vmatpush.bf16.msra.mxu0 %v615
    %680 = vmatpush.bf16.msra.mxu0 %v611
    %681 = vmatpush.bf16.msra.mxu0 %v607
    %682 = vmatpush.bf16.msra.mxu0 %v603
    %683 = vmatpush.bf16.msra.mxu0 %v599
    %684 = vmatmul.bf16.gmra.mxu0 %v242
    %v685 = vpop.f32.mrf.mxu0
    %v686 = vadd.f32 %v495, %v685
    %v687 = vpop.f32.mrf.mxu0
    %v688 = vadd.f32 %v495, %v687
    %689 = vdwg.mxu0
    %690 = vmatpush.bf16.msra.mxu0 %v628
    %691 = vmatpush.bf16.msra.mxu0 %v624
    %692 = vmatpush.bf16.msra.mxu0 %v620
    %693 = vmatpush.bf16.msra.mxu0 %v616
    %694 = vmatpush.bf16.msra.mxu0 %v612
    %695 = vmatpush.bf16.msra.mxu0 %v608
    %696 = vmatpush.bf16.msra.mxu0 %v604
    %697 = vmatpush.bf16.msra.mxu0 %v600
    %698 = vmatmul.bf16.gmra.mxu0 %v242
    %v699 = vpop.f32.mrf.mxu0
    %v700 = vadd.f32 %v496, %v699
    %v701 = vpop.f32.mrf.mxu0
    %v702 = vadd.f32 %v496, %v701
    %703 = vdwg.mxu0
    %704 = vmatpush.bf16.msra.mxu0 %v629
    %705 = vmatpush.bf16.msra.mxu0 %v625
    %706 = vmatpush.bf16.msra.mxu0 %v621
    %707 = vmatpush.bf16.msra.mxu0 %v617
    %708 = vmatpush.bf16.msra.mxu0 %v613
    %709 = vmatpush.bf16.msra.mxu0 %v609
    %710 = vmatpush.bf16.msra.mxu0 %v605
    %711 = vmatpush.bf16.msra.mxu0 %v601
    %712 = vmatmul.bf16.gmra.mxu0 %v242
    %v713 = vpop.f32.mrf.mxu0
    %v714 = vadd.f32 %v497, %v713
    %v715 = vpop.f32.mrf.mxu0
    %v716 = vadd.f32 %v497, %v715
    %717 = vdwg.mxu0
    %v718 = vmul.f32 %v672, 0.5
    %v719 = vmul.f32 %v686, 0.5
    %v720 = vmul.f32 %v700, 0.5
    %v721 = vmul.f32 %v714, 0.5
    %v722 = vmul.f32 %v674, 0.5
    %v723 = vmul.f32 %v688, 0.5
    %v724 = vmul.f32 %v702, 0.5
    %v725 = vmul.f32 %v716, 0.5
    %v726 = vmul.f32 %v672, 0.70710677
    %v727 = vmul.f32 %v686, 0.70710677
    %v728 = vmul.f32 %v700, 0.70710677
    %v729 = vmul.f32 %v714, 0.70710677
    %v730 = vmul.f32 %v674, 0.70710677
    %v731 = vmul.f32 %v688, 0.70710677
    %v732 = vmul.f32 %v702, 0.70710677
    %v733 = vmul.f32 %v716, 0.70710677
    %v734 = vmul.f32 %v726, %v726
    %v735 = vmin.f32 16.0, %v734
    %v736 = vmul.f32 %v735, 2.1237322e-06
    %v737 = vadd.f32 %v736, 0.00028619796
    %v738 = vmul.f32 %v735, %v737
    %v739 = vadd.f32 %v738, 0.0036580483
    %v740 = vmul.f32 %v735, %v739
    %v741 = vadd.f32 %v740, 0.05243302
    %v742 = vmul.f32 %v735, %v741
    %v743 = vadd.f32 %v742, 0.18741608
    %v744 = vmul.f32 %v735, %v743
    %v745 = vadd.f32 %v744, 1.1283791
    %v746 = vmul.f32 %v726, %v745
    %v747 = vmul.f32 %v735, 3.8918573e-05
    %v748 = vadd.f32 %v747, 0.001143296
    %v749 = vmul.f32 %v735, %v748
    %v750 = vadd.f32 %v749, 0.014752088
    %v751 = vmul.f32 %v735, %v750
    %v752 = vadd.f32 %v751, 0.112945676
    %v753 = vmul.f32 %v735, %v752
    %v754 = vadd.f32 %v753, 0.4994258
    %v755 = vmul.f32 %v735, %v754
    %v756 = vadd.f32 %v755, 1.0
    %v757 = vrcp.pop %v756
    %v758 = vmul.f32 %v756, %v757
    %v759 = vsub.f32 1.0, %v758
    %v760 = vmul.f32 %v757, %v759
    %v761 = vadd.f32 %v757, %v760
    %vm762 = vweird.f32 %v756
    %vm763 = vweird.f32 %v757
    %vm764 = vmor %vm762, %vm763
    %v765 = vsel %vm764, %v757, %v761
    %v766 = vand.u32 2147483647, %v756
    %vm767 = vcmp.eq.f32.partialorder %v766, 8.507059e+37
    %v768 = vand.u32 %v756, 2147483648
    %v769 = vor.u32 1.1754944e-38, %v768
    %v770 = vsel %vm767, %v769, %v765
    %v771 = vmul.f32 %v746, %v770
    %v772 = vmin.f32 %v771, 1.0
    %v773 = vmax.f32 %v772, -1.0
    %v774 = vmul.f32 %v727, %v727
    %v775 = vmin.f32 16.0, %v774
    %v776 = vmul.f32 %v775, 2.1237322e-06
    %v777 = vadd.f32 %v776, 0.00028619796
    %v778 = vmul.f32 %v775, %v777
    %v779 = vadd.f32 %v778, 0.0036580483
    %v780 = vmul.f32 %v775, %v779
    %v781 = vadd.f32 %v780, 0.05243302
    %v782 = vmul.f32 %v775, %v781
    %v783 = vadd.f32 %v782, 0.18741608
    %v784 = vmul.f32 %v775, %v783
    %v785 = vadd.f32 %v784, 1.1283791
    %v786 = vmul.f32 %v727, %v785
    %v787 = vmul.f32 %v775, 3.8918573e-05
    %v788 = vadd.f32 %v787, 0.001143296
    %v789 = vmul.f32 %v775, %v788
    %v790 = vadd.f32 %v789, 0.014752088
    %v791 = vmul.f32 %v775, %v790
    %v792 = vadd.f32 %v791, 0.112945676
    %v793 = vmul.f32 %v775, %v792
    %v794 = vadd.f32 %v793, 0.4994258
    %v795 = vmul.f32 %v775, %v794
    %v796 = vadd.f32 %v795, 1.0
    %v797 = vrcp.pop %v796
    %v798 = vmul.f32 %v796, %v797
    %v799 = vsub.f32 1.0, %v798
    %v800 = vmul.f32 %v797, %v799
    %v801 = vadd.f32 %v797, %v800
    %vm802 = vweird.f32 %v796
    %vm803 = vweird.f32 %v797
    %vm804 = vmor %vm802, %vm803
    %v805 = vsel %vm804, %v797, %v801
    %v806 = vand.u32 2147483647, %v796
    %vm807 = vcmp.eq.f32.partialorder %v806, 8.507059e+37
    %v808 = vand.u32 %v796, 2147483648
    %v809 = vor.u32 1.1754944e-38, %v808
    %v810 = vsel %vm807, %v809, %v805
    %v811 = vmul.f32 %v786, %v810
    %v812 = vmin.f32 %v811, 1.0
    %v813 = vmax.f32 %v812, -1.0
    %v814 = vmul.f32 %v728, %v728
    %v815 = vmin.f32 16.0, %v814
    %v816 = vmul.f32 %v815, 2.1237322e-06
    %v817 = vadd.f32 %v816, 0.00028619796
    %v818 = vmul.f32 %v815, %v817
    %v819 = vadd.f32 %v818, 0.0036580483
    %v820 = vmul.f32 %v815, %v819
    %v821 = vadd.f32 %v820, 0.05243302
    %v822 = vmul.f32 %v815, %v821
    %v823 = vadd.f32 %v822, 0.18741608
    %v824 = vmul.f32 %v815, %v823
    %v825 = vadd.f32 %v824, 1.1283791
    %v826 = vmul.f32 %v728, %v825
    %v827 = vmul.f32 %v815, 3.8918573e-05
    %v828 = vadd.f32 %v827, 0.001143296
    %v829 = vmul.f32 %v815, %v828
    %v830 = vadd.f32 %v829, 0.014752088
    %v831 = vmul.f32 %v815, %v830
    %v832 = vadd.f32 %v831, 0.112945676
    %v833 = vmul.f32 %v815, %v832
    %v834 = vadd.f32 %v833, 0.4994258
    %v835 = vmul.f32 %v815, %v834
    %v836 = vadd.f32 %v835, 1.0
    %v837 = vrcp.pop %v836
    %v838 = vmul.f32 %v836, %v837
    %v839 = vsub.f32 1.0, %v838
    %v840 = vmul.f32 %v837, %v839
    %v841 = vadd.f32 %v837, %v840
    %vm842 = vweird.f32 %v836
    %vm843 = vweird.f32 %v837
    %vm844 = vmor %vm842, %vm843
    %v845 = vsel %vm844, %v837, %v841
    %v846 = vand.u32 2147483647, %v836
    %vm847 = vcmp.eq.f32.partialorder %v846, 8.507059e+37
    %v848 = vand.u32 %v836, 2147483648
    %v849 = vor.u32 1.1754944e-38, %v848
    %v850 = vsel %vm847, %v849, %v845
    %v851 = vmul.f32 %v826, %v850
    %v852 = vmin.f32 %v851, 1.0
    %v853 = vmax.f32 %v852, -1.0
    %v854 = vmul.f32 %v729, %v729
    %v855 = vmin.f32 16.0, %v854
    %v856 = vmul.f32 %v855, 2.1237322e-06
    %v857 = vadd.f32 %v856, 0.00028619796
    %v858 = vmul.f32 %v855, %v857
    %v859 = vadd.f32 %v858, 0.0036580483
    %v860 = vmul.f32 %v855, %v859
    %v861 = vadd.f32 %v860, 0.05243302
    %v862 = vmul.f32 %v855, %v861
    %v863 = vadd.f32 %v862, 0.18741608
    %v864 = vmul.f32 %v855, %v863
    %v865 = vadd.f32 %v864, 1.1283791
    %v866 = vmul.f32 %v729, %v865
    %v867 = vmul.f32 %v855, 3.8918573e-05
    %v868 = vadd.f32 %v867, 0.001143296
    %v869 = vmul.f32 %v855, %v868
    %v870 = vadd.f32 %v869, 0.014752088
    %v871 = vmul.f32 %v855, %v870
    %v872 = vadd.f32 %v871, 0.112945676
    %v873 = vmul.f32 %v855, %v872
    %v874 = vadd.f32 %v873, 0.4994258
    %v875 = vmul.f32 %v855, %v874
    %v876 = vadd.f32 %v875, 1.0
    %v877 = vrcp.pop %v876
    %v878 = vmul.f32 %v876, %v877
    %v879 = vsub.f32 1.0, %v878
    %v880 = vmul.f32 %v877, %v879
    %v881 = vadd.f32 %v877, %v880
    %vm882 = vweird.f32 %v876
    %vm883 = vweird.f32 %v877
    %vm884 = vmor %vm882, %vm883
    %v885 = vsel %vm884, %v877, %v881
    %v886 = vand.u32 2147483647, %v876
    %vm887 = vcmp.eq.f32.partialorder %v886, 8.507059e+37
    %v888 = vand.u32 %v876, 2147483648
    %v889 = vor.u32 1.1754944e-38, %v888
    %v890 = vsel %vm887, %v889, %v885
    %v891 = vmul.f32 %v866, %v890
    %v892 = vmin.f32 %v891, 1.0
    %v893 = vmax.f32 %v892, -1.0
    %v894 = vmul.f32 %v730, %v730
    %v895 = vmin.f32 16.0, %v894
    %v896 = vmul.f32 %v895, 2.1237322e-06
    %v897 = vadd.f32 %v896, 0.00028619796
    %v898 = vmul.f32 %v895, %v897
    %v899 = vadd.f32 %v898, 0.0036580483
    %v900 = vmul.f32 %v895, %v899
    %v901 = vadd.f32 %v900, 0.05243302
    %v902 = vmul.f32 %v895, %v901
    %v903 = vadd.f32 %v902, 0.18741608
    %v904 = vmul.f32 %v895, %v903
    %v905 = vadd.f32 %v904, 1.1283791
    %v906 = vmul.f32 %v730, %v905
    %v907 = vmul.f32 %v895, 3.8918573e-05
    %v908 = vadd.f32 %v907, 0.001143296
    %v909 = vmul.f32 %v895, %v908
    %v910 = vadd.f32 %v909, 0.014752088
    %v911 = vmul.f32 %v895, %v910
    %v912 = vadd.f32 %v911, 0.112945676
    %v913 = vmul.f32 %v895, %v912
    %v914 = vadd.f32 %v913, 0.4994258
    %v915 = vmul.f32 %v895, %v914
    %v916 = vadd.f32 %v915, 1.0
    %v917 = vrcp.pop %v916
    %v918 = vmul.f32 %v916, %v917
    %v919 = vsub.f32 1.0, %v918
    %v920 = vmul.f32 %v917, %v919
    %v921 = vadd.f32 %v917, %v920
    %vm922 = vweird.f32 %v916
    %vm923 = vweird.f32 %v917
    %vm924 = vmor %vm922, %vm923
    %v925 = vsel %vm924, %v917, %v921
    %v926 = vand.u32 2147483647, %v916
    %vm927 = vcmp.eq.f32.partialorder %v926, 8.507059e+37
    %v928 = vand.u32 %v916, 2147483648
    %v929 = vor.u32 1.1754944e-38, %v928
    %v930 = vsel %vm927, %v929, %v925
    %v931 = vmul.f32 %v906, %v930
    %v932 = vmin.f32 %v931, 1.0
    %v933 = vmax.f32 %v932, -1.0
    %v934 = vmul.f32 %v731, %v731
    %v935 = vmin.f32 16.0, %v934
    %v936 = vmul.f32 %v935, 2.1237322e-06
    %v937 = vadd.f32 %v936, 0.00028619796
    %v938 = vmul.f32 %v935, %v937
    %v939 = vadd.f32 %v938, 0.0036580483
    %v940 = vmul.f32 %v935, %v939
    %v941 = vadd.f32 %v940, 0.05243302
    %v942 = vmul.f32 %v935, %v941
    %v943 = vadd.f32 %v942, 0.18741608
    %v944 = vmul.f32 %v935, %v943
    %v945 = vadd.f32 %v944, 1.1283791
    %v946 = vmul.f32 %v731, %v945
    %v947 = vmul.f32 %v935, 3.8918573e-05
    %v948 = vadd.f32 %v947, 0.001143296
    %v949 = vmul.f32 %v935, %v948
    %v950 = vadd.f32 %v949, 0.014752088
    %v951 = vmul.f32 %v935, %v950
    %v952 = vadd.f32 %v951, 0.112945676
    %v953 = vmul.f32 %v935, %v952
    %v954 = vadd.f32 %v953, 0.4994258
    %v955 = vmul.f32 %v935, %v954
    %v956 = vadd.f32 %v955, 1.0
    %v957 = vrcp.pop %v956
    %v958 = vmul.f32 %v956, %v957
    %v959 = vsub.f32 1.0, %v958
    %v960 = vmul.f32 %v957, %v959
    %v961 = vadd.f32 %v957, %v960
    %vm962 = vweird.f32 %v956
    %vm963 = vweird.f32 %v957
    %vm964 = vmor %vm962, %vm963
    %v965 = vsel %vm964, %v957, %v961
    %v966 = vand.u32 2147483647, %v956
    %vm967 = vcmp.eq.f32.partialorder %v966, 8.507059e+37
    %v968 = vand.u32 %v956, 2147483648
    %v969 = vor.u32 1.1754944e-38, %v968
    %v970 = vsel %vm967, %v969, %v965
    %v971 = vmul.f32 %v946, %v970
    %v972 = vmin.f32 %v971, 1.0
    %v973 = vmax.f32 %v972, -1.0
    %v974 = vmul.f32 %v732, %v732
    %v975 = vmin.f32 16.0, %v974
    %v976 = vmul.f32 %v975, 2.1237322e-06
    %v977 = vadd.f32 %v976, 0.00028619796
    %v978 = vmul.f32 %v975, %v977
    %v979 = vadd.f32 %v978, 0.0036580483
    %v980 = vmul.f32 %v975, %v979
    %v981 = vadd.f32 %v980, 0.05243302
    %v982 = vmul.f32 %v975, %v981
    %v983 = vadd.f32 %v982, 0.18741608
    %v984 = vmul.f32 %v975, %v983
    %v985 = vadd.f32 %v984, 1.1283791
    %v986 = vmul.f32 %v732, %v985
    %v987 = vmul.f32 %v975, 3.8918573e-05
    %v988 = vadd.f32 %v987, 0.001143296
    %v989 = vmul.f32 %v975, %v988
    %v990 = vadd.f32 %v989, 0.014752088
    %v991 = vmul.f32 %v975, %v990
    %v992 = vadd.f32 %v991, 0.112945676
    %v993 = vmul.f32 %v975, %v992
    %v994 = vadd.f32 %v993, 0.4994258
    %v995 = vmul.f32 %v975, %v994
    %v996 = vadd.f32 %v995, 1.0
    %v997 = vrcp.pop %v996
    %v998 = vmul.f32 %v996, %v997
    %v999 = vsub.f32 1.0, %v998
    %v1000 = vmul.f32 %v997, %v999
    %v1001 = vadd.f32 %v997, %v1000
    %vm1002 = vweird.f32 %v996
    %vm1003 = vweird.f32 %v997
    %vm1004 = vmor %vm1002, %vm1003
    %v1005 = vsel %vm1004, %v997, %v1001
    %v1006 = vand.u32 2147483647, %v996
    %vm1007 = vcmp.eq.f32.partialorder %v1006, 8.507059e+37
    %v1008 = vand.u32 %v996, 2147483648
    %v1009 = vor.u32 1.1754944e-38, %v1008
    %v1010 = vsel %vm1007, %v1009, %v1005
    %v1011 = vmul.f32 %v986, %v1010
    %v1012 = vmin.f32 %v1011, 1.0
    %v1013 = vmax.f32 %v1012, -1.0
    %v1014 = vmul.f32 %v733, %v733
    %v1015 = vmin.f32 16.0, %v1014
    %v1016 = vmul.f32 %v1015, 2.1237322e-06
    %v1017 = vadd.f32 %v1016, 0.00028619796
    %v1018 = vmul.f32 %v1015, %v1017
    %v1019 = vadd.f32 %v1018, 0.0036580483
    %v1020 = vmul.f32 %v1015, %v1019
    %v1021 = vadd.f32 %v1020, 0.05243302
    %v1022 = vmul.f32 %v1015, %v1021
    %v1023 = vadd.f32 %v1022, 0.18741608
    %v1024 = vmul.f32 %v1015, %v1023
    %v1025 = vadd.f32 %v1024, 1.1283791
    %v1026 = vmul.f32 %v733, %v1025
    %v1027 = vmul.f32 %v1015, 3.8918573e-05
    %v1028 = vadd.f32 %v1027, 0.001143296
    %v1029 = vmul.f32 %v1015, %v1028
    %v1030 = vadd.f32 %v1029, 0.014752088
    %v1031 = vmul.f32 %v1015, %v1030
    %v1032 = vadd.f32 %v1031, 0.112945676
    %v1033 = vmul.f32 %v1015, %v1032
    %v1034 = vadd.f32 %v1033, 0.4994258
    %v1035 = vmul.f32 %v1015, %v1034
    %v1036 = vadd.f32 %v1035, 1.0
    %v1037 = vrcp.pop %v1036
    %v1038 = vmul.f32 %v1036, %v1037
    %v1039 = vsub.f32 1.0, %v1038
    %v1040 = vmul.f32 %v1037, %v1039
    %v1041 = vadd.f32 %v1037, %v1040
    %vm1042 = vweird.f32 %v1036
    %vm1043 = vweird.f32 %v1037
    %vm1044 = vmor %vm1042, %vm1043
    %v1045 = vsel %vm1044, %v1037, %v1041
    %v1046 = vand.u32 2147483647, %v1036
    %vm1047 = vcmp.eq.f32.partialorder %v1046, 8.507059e+37
    %v1048 = vand.u32 %v1036, 2147483648
    %v1049 = vor.u32 1.1754944e-38, %v1048
    %v1050 = vsel %vm1047, %v1049, %v1045
    %v1051 = vmul.f32 %v1026, %v1050
    %v1052 = vmin.f32 %v1051, 1.0
    %v1053 = vmax.f32 %v1052, -1.0
    %v1054 = vadd.f32 %v773, 1.0
    %v1055 = vadd.f32 %v813, 1.0
    %v1056 = vadd.f32 %v853, 1.0
    %v1057 = vadd.f32 %v893, 1.0
    %v1058 = vadd.f32 %v933, 1.0
    %v1059 = vadd.f32 %v973, 1.0
    %v1060 = vadd.f32 %v1013, 1.0
    %v1061 = vadd.f32 %v1053, 1.0
    %v1062 = vmul.f32 %v718, %v1054
    %v1063 = vmul.f32 %v719, %v1055
    %v1064 = vmul.f32 %v720, %v1056
    %v1065 = vmul.f32 %v721, %v1057
    %v1066 = vmul.f32 %v722, %v1058
    %v1067 = vmul.f32 %v723, %v1059
    %v1068 = vmul.f32 %v724, %v1060
    %v1069 = vmul.f32 %v725, %v1061
    %v1070 = vmul.f32 %v414, %v1062
    %v1071 = vmul.f32 %v428, %v1063
    %v1072 = vmul.f32 %v442, %v1064
    %v1073 = vmul.f32 %v456, %v1065
    %v1074 = vmul.f32 %v416, %v1066
    %v1075 = vmul.f32 %v430, %v1067
    %v1076 = vmul.f32 %v444, %v1068
    %v1077 = vmul.f32 %v458, %v1069
    %v1078 = vpack.c.bf16 %v1074, %v1070
    %v1079 = vpack.c.bf16 %v1075, %v1071
    %v1080 = vpack.c.bf16 %v1076, %v1072
    %v1081 = vpack.c.bf16 %v1077, %v1073
    %v1082 = vld [vmem:[#allocation3] sm:$0xff]
    %v1083 = vld [vmem:[#allocation3 + $0x8] sm:$0xff]
    %v1084 = vld [vmem:[#allocation13] sm:$0xf]
    %v1085 = vld [vmem:[#allocation13 + $0x4] sm:$0xf]
    %v1086 = vld [vmem:[#allocation13 + $0x8] sm:$0xf]
    %v1087 = vld [vmem:[#allocation13 + $0xc] sm:$0xf]
    %v1088 = vld [vmem:[#allocation13 + $0x10] sm:$0xf]
    %v1089 = vld [vmem:[#allocation13 + $0x14] sm:$0xf]
    %v1090 = vld [vmem:[#allocation13 + $0x18] sm:$0xf]
    %v1091 = vld [vmem:[#allocation13 + $0x1c] sm:$0xf]
    %v1092 = vld [vmem:[#allocation13 + $0x20] sm:$0xf]
    %v1093 = vld [vmem:[#allocation13 + $0x24] sm:$0xf]
    %v1094 = vld [vmem:[#allocation13 + $0x28] sm:$0xf]
    %v1095 = vld [vmem:[#allocation13 + $0x2c] sm:$0xf]
    %v1096 = vld [vmem:[#allocation13 + $0x30] sm:$0xf]
    %v1097 = vld [vmem:[#allocation13 + $0x34] sm:$0xf]
    %v1098 = vld [vmem:[#allocation13 + $0x38] sm:$0xf]
    %v1099 = vld [vmem:[#allocation13 + $0x3c] sm:$0xf]
    %v1100 = vld [vmem:[#allocation13 + $0x40] sm:$0xf]
    %v1101 = vld [vmem:[#allocation13 + $0x44] sm:$0xf]
    %v1102 = vld [vmem:[#allocation13 + $0x48] sm:$0xf]
    %v1103 = vld [vmem:[#allocation13 + $0x4c] sm:$0xf]
    %v1104 = vld [vmem:[#allocation13 + $0x50] sm:$0xf]
    %v1105 = vld [vmem:[#allocation13 + $0x54] sm:$0xf]
    %v1106 = vld [vmem:[#allocation13 + $0x58] sm:$0xf]
    %v1107 = vld [vmem:[#allocation13 + $0x5c] sm:$0xf]
    %v1108 = vld [vmem:[#allocation13 + $0x60] sm:$0xf]
    %v1109 = vld [vmem:[#allocation13 + $0x64] sm:$0xf]
    %v1110 = vld [vmem:[#allocation13 + $0x68] sm:$0xf]
    %v1111 = vld [vmem:[#allocation13 + $0x6c] sm:$0xf]
    %v1112 = vld [vmem:[#allocation13 + $0x70] sm:$0xf]
    %v1113 = vld [vmem:[#allocation13 + $0x74] sm:$0xf]
    %v1114 = vld [vmem:[#allocation13 + $0x78] sm:$0xf]
    %v1115 = vld [vmem:[#allocation13 + $0x7c] sm:$0xf]
    %v1116 = vld [vmem:[#allocation13 + $0x80] sm:$0xf]
    %v1117 = vld [vmem:[#allocation13 + $0x84] sm:$0xf]
    %v1118 = vld [vmem:[#allocation13 + $0x88] sm:$0xf]
    %v1119 = vld [vmem:[#allocation13 + $0x8c] sm:$0xf]
    %v1120 = vld [vmem:[#allocation13 + $0x90] sm:$0xf]
    %v1121 = vld [vmem:[#allocation13 + $0x94] sm:$0xf]
    %v1122 = vld [vmem:[#allocation13 + $0x98] sm:$0xf]
    %v1123 = vld [vmem:[#allocation13 + $0x9c] sm:$0xf]
    %v1124 = vld [vmem:[#allocation13 + $0xa0] sm:$0xf]
    %v1125 = vld [vmem:[#allocation13 + $0xa4] sm:$0xf]
    %v1126 = vld [vmem:[#allocation13 + $0xa8] sm:$0xf]
    %v1127 = vld [vmem:[#allocation13 + $0xac] sm:$0xf]
    %v1128 = vld [vmem:[#allocation13 + $0xb0] sm:$0xf]
    %v1129 = vld [vmem:[#allocation13 + $0xb4] sm:$0xf]
    %v1130 = vld [vmem:[#allocation13 + $0xb8] sm:$0xf]
    %v1131 = vld [vmem:[#allocation13 + $0xbc] sm:$0xf]
    %v1132 = vld [vmem:[#allocation13 + $0xc0] sm:$0xf]
    %v1133 = vld [vmem:[#allocation13 + $0xc4] sm:$0xf]
    %v1134 = vld [vmem:[#allocation13 + $0xc8] sm:$0xf]
    %v1135 = vld [vmem:[#allocation13 + $0xcc] sm:$0xf]
    %v1136 = vld [vmem:[#allocation13 + $0xd0] sm:$0xf]
    %v1137 = vld [vmem:[#allocation13 + $0xd4] sm:$0xf]
    %v1138 = vld [vmem:[#allocation13 + $0xd8] sm:$0xf]
    %v1139 = vld [vmem:[#allocation13 + $0xdc] sm:$0xf]
    %v1140 = vld [vmem:[#allocation13 + $0xe0] sm:$0xf]
    %v1141 = vld [vmem:[#allocation13 + $0xe4] sm:$0xf]
    %v1142 = vld [vmem:[#allocation13 + $0xe8] sm:$0xf]
    %v1143 = vld [vmem:[#allocation13 + $0xec] sm:$0xf]
    %v1144 = vld [vmem:[#allocation13 + $0xf0] sm:$0xf]
    %v1145 = vld [vmem:[#allocation13 + $0xf4] sm:$0xf]
    %v1146 = vld [vmem:[#allocation13 + $0xf8] sm:$0xf]
    %v1147 = vld [vmem:[#allocation13 + $0xfc] sm:$0xf]
    %v1212 = vunpack.c.l.b16 %v1084
    %v1213 = vunpack.c.l.b16 %v1085
    %v1214 = vunpack.c.l.b16 %v1086
    %v1215 = vunpack.c.l.b16 %v1087
    %v1216 = vunpack.c.l.b16 %v1088
    %v1217 = vunpack.c.l.b16 %v1089
    %v1218 = vunpack.c.l.b16 %v1090
    %v1219 = vunpack.c.l.b16 %v1091
    %v1220 = vunpack.c.l.b16 %v1092
    %v1221 = vunpack.c.l.b16 %v1093
    %v1222 = vunpack.c.l.b16 %v1094
    %v1223 = vunpack.c.l.b16 %v1095
    %v1224 = vunpack.c.l.b16 %v1096
    %v1225 = vunpack.c.l.b16 %v1097
    %v1226 = vunpack.c.l.b16 %v1098
    %v1227 = vunpack.c.l.b16 %v1099
    %v1228 = vunpack.c.l.b16 %v1100
    %v1229 = vunpack.c.l.b16 %v1101
    %v1230 = vunpack.c.l.b16 %v1102
    %v1231 = vunpack.c.l.b16 %v1103
    %v1232 = vunpack.c.l.b16 %v1104
    %v1233 = vunpack.c.l.b16 %v1105
    %v1234 = vunpack.c.l.b16 %v1106
    %v1235 = vunpack.c.l.b16 %v1107
    %v1236 = vunpack.c.l.b16 %v1108
    %v1237 = vunpack.c.l.b16 %v1109
    %v1238 = vunpack.c.l.b16 %v1110
    %v1239 = vunpack.c.l.b16 %v1111
    %v1240 = vunpack.c.l.b16 %v1112
    %v1241 = vunpack.c.l.b16 %v1113
    %v1242 = vunpack.c.l.b16 %v1114
    %v1243 = vunpack.c.l.b16 %v1115
    %v1244 = vunpack.c.l.b16 %v1116
    %v1245 = vunpack.c.l.b16 %v1117
    %v1246 = vunpack.c.l.b16 %v1118
    %v1247 = vunpack.c.l.b16 %v1119
    %v1248 = vunpack.c.l.b16 %v1120
    %v1249 = vunpack.c.l.b16 %v1121
    %v1250 = vunpack.c.l.b16 %v1122
    %v1251 = vunpack.c.l.b16 %v1123
    %v1252 = vunpack.c.l.b16 %v1124
    %v1253 = vunpack.c.l.b16 %v1125
    %v1254 = vunpack.c.l.b16 %v1126
    %v1255 = vunpack.c.l.b16 %v1127
    %v1256 = vunpack.c.l.b16 %v1128
    %v1257 = vunpack.c.l.b16 %v1129
    %v1258 = vunpack.c.l.b16 %v1130
    %v1259 = vunpack.c.l.b16 %v1131
    %v1260 = vunpack.c.l.b16 %v1132
    %v1261 = vunpack.c.l.b16 %v1133
    %v1262 = vunpack.c.l.b16 %v1134
    %v1263 = vunpack.c.l.b16 %v1135
    %v1264 = vunpack.c.l.b16 %v1136
    %v1265 = vunpack.c.l.b16 %v1137
    %v1266 = vunpack.c.l.b16 %v1138
    %v1267 = vunpack.c.l.b16 %v1139
    %v1268 = vunpack.c.l.b16 %v1140
    %v1269 = vunpack.c.l.b16 %v1141
    %v1270 = vunpack.c.l.b16 %v1142
    %v1271 = vunpack.c.l.b16 %v1143
    %v1272 = vunpack.c.l.b16 %v1144
    %v1273 = vunpack.c.l.b16 %v1145
    %v1274 = vunpack.c.l.b16 %v1146
    %v1275 = vunpack.c.l.b16 %v1147
    %v1276 = vpack.c.b16 %v1213, %v1212
    %v1277 = vpack.c.b16 %v1215, %v1214
    %v1278 = vpack.c.b16 %v1217, %v1216
    %v1279 = vpack.c.b16 %v1219, %v1218
    %v1280 = vpack.c.b16 %v1221, %v1220
    %v1281 = vpack.c.b16 %v1223, %v1222
    %v1282 = vpack.c.b16 %v1225, %v1224
    %v1283 = vpack.c.b16 %v1227, %v1226
    %v1284 = vpack.c.b16 %v1229, %v1228
    %v1285 = vpack.c.b16 %v1231, %v1230
    %v1286 = vpack.c.b16 %v1233, %v1232
    %v1287 = vpack.c.b16 %v1235, %v1234
    %v1288 = vpack.c.b16 %v1237, %v1236
    %v1289 = vpack.c.b16 %v1239, %v1238
    %v1290 = vpack.c.b16 %v1241, %v1240
    %v1291 = vpack.c.b16 %v1243, %v1242
    %v1292 = vpack.c.b16 %v1245, %v1244
    %v1293 = vpack.c.b16 %v1247, %v1246
    %v1294 = vpack.c.b16 %v1249, %v1248
    %v1295 = vpack.c.b16 %v1251, %v1250
    %v1296 = vpack.c.b16 %v1253, %v1252
    %v1297 = vpack.c.b16 %v1255, %v1254
    %v1298 = vpack.c.b16 %v1257, %v1256
    %v1299 = vpack.c.b16 %v1259, %v1258
    %v1300 = vpack.c.b16 %v1261, %v1260
    %v1301 = vpack.c.b16 %v1263, %v1262
    %v1302 = vpack.c.b16 %v1265, %v1264
    %v1303 = vpack.c.b16 %v1267, %v1266
    %v1304 = vpack.c.b16 %v1269, %v1268
    %v1305 = vpack.c.b16 %v1271, %v1270
    %v1306 = vpack.c.b16 %v1273, %v1272
    %v1307 = vpack.c.b16 %v1275, %v1274
    %1340 = vmatpush.bf16.msra.mxu0 %v1283
    %1341 = vmatpush.bf16.msra.mxu0 %v1282
    %1342 = vmatpush.bf16.msra.mxu0 %v1281
    %1343 = vmatpush.bf16.msra.mxu0 %v1280
    %1344 = vmatpush.bf16.msra.mxu0 %v1279
    %1345 = vmatpush.bf16.msra.mxu0 %v1278
    %1346 = vmatpush.bf16.msra.mxu0 %v1277
    %1347 = vmatpush.bf16.msra.mxu0 %v1276
    %1348 = vmatmul.bf16.gmra.mxu0 %v1078
    %v1349 = vpop.f32.mrf.mxu0
    %v1350 = vadd.f32 0.0, %v1349
    %v1351 = vpop.f32.mrf.mxu0
    %v1352 = vadd.f32 0.0, %v1351
    %1353 = vdwg.mxu0
    %1354 = vmatpush.bf16.msra.mxu0 %v1291
    %1355 = vmatpush.bf16.msra.mxu0 %v1290
    %1356 = vmatpush.bf16.msra.mxu0 %v1289
    %1357 = vmatpush.bf16.msra.mxu0 %v1288
    %1358 = vmatpush.bf16.msra.mxu0 %v1287
    %1359 = vmatpush.bf16.msra.mxu0 %v1286
    %1360 = vmatpush.bf16.msra.mxu0 %v1285
    %1361 = vmatpush.bf16.msra.mxu0 %v1284
    %1362 = vmatmul.bf16.gmra.mxu0 %v1079
    %v1363 = vpop.f32.mrf.mxu0
    %v1364 = vadd.f32 %v1350, %v1363
    %v1365 = vpop.f32.mrf.mxu0
    %v1366 = vadd.f32 %v1352, %v1365
    %1367 = vdwg.mxu0
    %1368 = vmatpush.bf16.msra.mxu0 %v1299
    %1369 = vmatpush.bf16.msra.mxu0 %v1298
    %1370 = vmatpush.bf16.msra.mxu0 %v1297
    %1371 = vmatpush.bf16.msra.mxu0 %v1296
    %1372 = vmatpush.bf16.msra.mxu0 %v1295
    %1373 = vmatpush.bf16.msra.mxu0 %v1294
    %1374 = vmatpush.bf16.msra.mxu0 %v1293
    %1375 = vmatpush.bf16.msra.mxu0 %v1292
    %1376 = vmatmul.bf16.gmra.mxu0 %v1080
    %v1377 = vpop.f32.mrf.mxu0
    %v1378 = vadd.f32 %v1364, %v1377
    %v1379 = vpop.f32.mrf.mxu0
    %v1380 = vadd.f32 %v1366, %v1379
    %1381 = vdwg.mxu0
    %1382 = vmatpush.bf16.msra.mxu0 %v1307
    %1383 = vmatpush.bf16.msra.mxu0 %v1306
    %1384 = vmatpush.bf16.msra.mxu0 %v1305
    %1385 = vmatpush.bf16.msra.mxu0 %v1304
    %1386 = vmatpush.bf16.msra.mxu0 %v1303
    %1387 = vmatpush.bf16.msra.mxu0 %v1302
    %1388 = vmatpush.bf16.msra.mxu0 %v1301
    %1389 = vmatpush.bf16.msra.mxu0 %v1300
    %1390 = vmatmul.bf16.gmra.mxu0 %v1081
    %v1391 = vpop.f32.mrf.mxu0
    %v1392 = vadd.f32 %v1378, %v1391
    %v1393 = vpop.f32.mrf.mxu0
    %v1394 = vadd.f32 %v1380, %v1393
    %1395 = vdwg.mxu0
    %v1396 = vadd.f32 %v1082, %v1392
    %v1397 = vadd.f32 %v1083, %v1394
    %1398 = vst [vmem:[#allocation3] sm:$0xff] %v1396
    %1399 = vst [vmem:[#allocation3 + $0x8] sm:$0xff] %v1397
    // Predicated region
    $region66: #{feedforward.1} parent=1 // pred_check
      %p1400 = pneg %p123
    $region67: #{feedforward.1} parent=1 // pred_check_branch
      %1402 = sbr.rel (%p1400) target = $region69
    $region68: #{feedforward.1} parent=1 // pred_region
      %v1403 = vld [vmem:[#allocation3] sm:$0xff]
      %v1404 = vld [vmem:[#allocation3 + $0x8] sm:$0xff]
      %v1405 = vld [vmem:[%s8] sm:$0x1]
      %v1407 = vperm.slane %v1405, 0
      %v1409 = vadd.f32 %v1403, %v1407
      %v1410 = vadd.f32 %v1404, %v1407
      %1411 = vst [vmem:[#allocation15] sm:$0xff] %v1409
      %1412 = vst [vmem:[#allocation15 + $0x8] sm:$0xff] %v1410
    $region69: #{feedforward.1} parent=1 // pred_fallthru
      _
    // Predicated region
    $region70: #{feedforward.1} parent=1 // pred_check
      _
    $region71: #{feedforward.1} parent=1 // pred_check_branch
      %1414 = sbr.rel (0) target = $region73
    $region72: #{feedforward.1} parent=1 // pred_region
      %1416 = vsyncadd [#allocation6], 0
      %s1417 = sshll.u32 [#allocation15], 4
      %s1418 = int_to_ptr.vmem [resolvable:$true] %s1417
      %s1419 = sshll.u32 %s9, 4
      %s1420 = int_to_ptr.hbm [resolvable:$true] %s1419
      %1425 = dma.vmem_to_hbm [thread:$0]  %s1418, 256, %s1420, [#allocation6], 128, 128, 8
    $region73: #{feedforward.1} parent=1 // pred_fallthru
      _
    // Predicated region
    $region74: #{feedforward.1} parent=1 // pred_check
      _
    $region75: #{feedforward.1} parent=1 // pred_check_branch
      %1427 = sbr.rel (0) target = $region77
    $region76: #{feedforward.1} parent=1 // pred_region
      %1429 = dma.done [#allocation6], 256
    $region77: #{feedforward.1} parent=1 // pred_fallthru
      _
    %1430 = vsyncpa [#allocation5], 1
    %1431 = vsyncpa [#allocation8], 1
    %1432 = vsyncpa [#allocation11], 1
    %1433 = vsyncpa [#allocation14], 1
    %1434 = vsyncpa [#allocation6], 1

</llo_original>
